<compile_context>
chip_gen: v5e
topology: v5e:2x2
jax: 0.10.0
libtpu: 0.0.40
codegen_flags: <defaults>
</compile_context>

<pallas_src>
import numpy as np
import jax
import jax.numpy as jnp
from jax.experimental import pallas as pl
from jax.experimental.pallas import tpu as pltpu

# ----------------------------- configuration ------------------------------
B_BONES = 8          # num_coords (number of bones)
W_HIDDEN = 64        # CondMLP hidden width (W)
T_CHANNELS = 32      # TimeEmbedding output channels (synthetic, kept small)
INST_CHANNELS = 32   # instance code channels
NUM_FREQ_T = 6       # time Fourier frequencies
NUM_FREQ_XYZ = 0     # -> PosEmbedding is identity
INIT_SCALE = 0.03
TILE_P = 1024        # points per grid step (multiple of 256; lane-dense)


# ----------------------------- Pallas kernel -------------------------------
def skinning_kernel(xyz_ref, qr_ref, qd_ref, ig_ref, cond_ref,
                    w0_ref, w1_ref, b1_ref, wf_ref, bf_ref,
                    skin_ref, delta_ref):
    B = qr_ref.shape[0] // 4                 # bones on sublanes
    TP = qr_ref.shape[1]                     # points on lanes

    xyz = xyz_ref[...]                       # (3, TP)
    # hoisted broadcasts of the point coords to full (B, TP) tiles
    px = jnp.broadcast_to(xyz[0:1, :], (B, TP))
    py = jnp.broadcast_to(xyz[1:2, :], (B, TP))
    pz = jnp.broadcast_to(xyz[2:3, :], (B, TP))

    # quaternion components, row-blocked [w | x | y | z] x B bones
    qw = qr_ref[0:B, :]
    qx = qr_ref[B:2 * B, :]
    qy = qr_ref[2 * B:3 * B, :]
    qz = qr_ref[3 * B:4 * B, :]
    dw = qd_ref[0:B, :]
    dx = qd_ref[B:2 * B, :]
    dy = qd_ref[2 * B:3 * B, :]
    dz = qd_ref[3 * B:4 * B, :]

    # --- rotate point by conjugate real quaternion (qw, -qx, -qy, -qz) ---
    vx, vy, vz = -qx, -qy, -qz
    c1x = vy * pz - vz * py
    c1y = vz * px - vx * pz
    c1z = vx * py - vy * px
    c2x = vy * c1z - vz * c1y
    c2y = vz * c1x - vx * c1z
    c2z = vx * c1y - vy * c1x
    rx = px + 2.0 * (qw * c1x + c2x)
    ry = py + 2.0 * (qw * c1y + c2y)
    rz = pz + 2.0 * (qw * c1z + c2z)

    # --- translation of the inverse dual quaternion: 2 * vec(conj(qd) * qr) ---
    tx = 2.0 * (dw * qx - dx * qw - dy * qz + dz * qy)
    ty = 2.0 * (dw * qy + dx * qz - dy * qw - dz * qx)
    tz = 2.0 * (dw * qz - dx * qy + dy * qx - dz * qw)

    # --- Gaussian scaling via precomputed reciprocal (multiply, no divide) ---
    igx = ig_ref[0:B, :]                     # (B, 1) -> lane-broadcast in mul
    igy = ig_ref[B:2 * B, :]
    igz = ig_ref[2 * B:3 * B, :]
    xb = (rx + tx) * igx                     # (B, TP)
    yb = (ry + ty) * igy
    zb = (rz + tz) * igz

    dist2 = xb * xb + yb * yb + zb * zb      # (B, TP)

    # Bone-coordinate features, rows ordered [x(B) | y(B) | z(B)]; the first
    # layer weights were row-permuted in the wrapper to match torch's
    # interleaved (bone, xyz) ordering.
    featT = jnp.concatenate([xb, yb, zb], axis=0)        # (3B, TP)

    # --- Cond-MLP, transposed orientation (channels x points) on the MXU ---
    h = jnp.dot(w0_ref[...], featT, preferred_element_type=jnp.float32)
    h = h + cond_ref[...]                    # per-tile (Wh, 1) cond+b0 bias
    h = jnp.maximum(h, 0.0)
    h = jnp.dot(w1_ref[...], h, preferred_element_type=jnp.float32) + b1_ref[...]
    h = jnp.maximum(h, 0.0)
    delta = jnp.dot(wf_ref[...], h, preferred_element_type=jnp.float32) + bf_ref[...]
    delta = jnp.maximum(delta, 0.0) * 0.1    # (B, TP)

    delta_ref[...] = delta
    skin_ref[...] = -(dist2 + delta)


# ----------------------------- wrapper --------------------------------------
def skinning_field_forward(xyz, dq_r, dq_d, log_gauss, cond, mlp_params,
                           tile_p=TILE_P):
    """xyz: (M,N,D,3); dq_r/dq_d: (M,N,D,B,4); cond: (M, T_CHANNELS+INST_CHANNELS)
    Returns (skin, delta), each (M,N,D,B)."""
    M, N, Dp, _ = xyz.shape
    B = dq_r.shape[-2]
    f32 = jnp.float32

    NDp = N * Dp
    tiles_per_frame = -(-NDp // tile_p)          # cdiv: tiles per frame
    NDp_pad = tiles_per_frame * tile_p
    num_tiles = M * tiles_per_frame
    P_pad = M * NDp_pad
    pad = NDp_pad - NDp

    xyz_m = xyz.reshape(M, NDp, 3).astype(f32)
    qr_m = dq_r.reshape(M, NDp, B, 4).astype(f32)
    qd_m = dq_d.reshape(M, NDp, B, 4).astype(f32)
    if pad:
        xyz_m = jnp.pad(xyz_m, ((0, 0), (0, pad), (0, 0)))
        qr_m = jnp.pad(qr_m, ((0, 0), (0, pad), (0, 0), (0, 0)))
        qd_m = jnp.pad(qd_m, ((0, 0), (0, pad), (0, 0), (0, 0)))

    # channel-major, point-lane-dense layouts
    xyz_t = xyz_m.transpose(2, 0, 1).reshape(3, P_pad)              # (3, P)
    qr_t = qr_m.transpose(3, 2, 0, 1).reshape(4 * B, P_pad)         # row c*B+b
    qd_t = qd_m.transpose(3, 2, 0, 1).reshape(4 * B, P_pad)

    # reciprocal Gaussian scales, rows ordered [x(B) | y(B) | z(B)]
    inv_gauss = jnp.exp(-log_gauss.astype(f32)).T.reshape(3 * B, 1)  # (3B, 1)

    w0, b0, w1, b1, wf, bf = [p.astype(f32) for p in mlp_params]
    Wh = w0.shape[-1]
    # permute first-layer xyz rows: kernel feat order [x(B)|y(B)|z(B)] vs
    # torch's interleaved [b0x,b0y,b0z,b1x,...]; row c*B+b <- row 3*b+c.
    perm = np.array([3 * b + c for c in range(3) for b in range(B)], dtype=np.int32)
    w0xyz_t = w0[perm].T                                            # (Wh, 3B)
    w1_t = w1.T                                                     # (Wh, Wh)
    wf_t = wf.T                                                     # (B, Wh)

    # Hoist the cond branch of layer 0: per-frame (Wh,) bias, replicated
    # per tile as a tiny (num_tiles, Wh, 1) table (one frame per tile).
    cond_proj = cond.astype(f32) @ w0[3 * B:] + b0                  # (M, Wh)
    tile_frame = np.repeat(np.arange(M), tiles_per_frame)           # (num_tiles,)
    cond_bias = cond_proj[tile_frame][..., None]                    # (num_tiles, Wh, 1)

    fixed = lambda i: (0, 0)
    grid = (num_tiles,)

    skin_t, delta_t = pl.pallas_call(
        skinning_kernel,
        out_shape=(jax.ShapeDtypeStruct((B, P_pad), f32),
                   jax.ShapeDtypeStruct((B, P_pad), f32)),
        grid_spec=pltpu.PrefetchScalarGridSpec(
            num_scalar_prefetch=0,
            grid=grid,
            in_specs=[
                pl.BlockSpec((3, tile_p), lambda i: (0, i)),        # xyz
                pl.BlockSpec((4 * B, tile_p), lambda i: (0, i)),    # qr
                pl.BlockSpec((4 * B, tile_p), lambda i: (0, i)),    # qd
                pl.BlockSpec((3 * B, 1), fixed),                    # inv_gauss
                pl.BlockSpec((None, Wh, 1), lambda i: (i, 0, 0)),   # cond bias (per tile)
                pl.BlockSpec((Wh, 3 * B), fixed),                   # W0xyz^T
                pl.BlockSpec((Wh, Wh), fixed),                      # W1^T
                pl.BlockSpec((Wh, 1), fixed),                       # b1
                pl.BlockSpec((B, Wh), fixed),                       # Wf^T
                pl.BlockSpec((B, 1), fixed),                        # bf
            ],
            out_specs=[pl.BlockSpec((B, tile_p), lambda i: (0, i)),
                       pl.BlockSpec((B, tile_p), lambda i: (0, i))],
        ),
        compiler_params=pltpu.CompilerParams(
            dimension_semantics=("parallel",)),
    )(xyz_t, qr_t, qd_t, inv_gauss, cond_bias,
      w0xyz_t, w1_t, b1.reshape(Wh, 1), wf_t, bf.reshape(B, 1))

    # un-transpose / drop per-frame padding
    skin = (skin_t.reshape(B, M, NDp_pad)[:, :, :NDp]
            .transpose(1, 2, 0).reshape(M, N, Dp, B))
    delta = (delta_t.reshape(B, M, NDp_pad)[:, :, :NDp]
             .transpose(1, 2, 0).reshape(M, N, Dp, B))
    return skin, delta


# ----------------------------- glue: embeddings ------------------------------
def time_embedding(frame_id, num_frames, map_w, map_b):
    """Fourier embedding of normalized time + linear mapping -> (M, T_CHANNELS)."""
    t = frame_id.astype(jnp.float32) / max(num_frames - 1, 1) * 2.0 - 1.0
    feats = [t[:, None]]
    for k in range(NUM_FREQ_T):
        f = 2.0 ** k
        feats.append(jnp.sin(f * t)[:, None])
        feats.append(jnp.cos(f * t)[:, None])
    fe = jnp.concatenate(feats, axis=-1)          # (M, 2*NUM_FREQ_T+1)
    return fe @ map_w + map_b


# ----------------------------- reference (pure JAX) --------------------------
def quat_mul(a, b):
    aw, ax, ay, az = a[..., 0], a[..., 1], a[..., 2], a[..., 3]
    bw, bx, by, bz = b[..., 0], b[..., 1], b[..., 2], b[..., 3]
    return jnp.stack([
        aw * bw - ax * bx - ay * by - az * bz,
        aw * bx + ax * bw + ay * bz - az * by,
        aw * by - ax * bz + ay * bw + az * bx,
        aw * bz + ax * by - ay * bx + az * bw,
    ], axis=-1)


def quat_conj(q):
    return q * jnp.array([1.0, -1.0, -1.0, -1.0], dtype=q.dtype)


def quat_apply(q, p):
    p_q = jnp.concatenate([jnp.zeros_like(p[..., :1]), p], axis=-1)
    return quat_mul(quat_mul(q, p_q), quat_conj(q))[..., 1:]


def reference_forward(xyz, dq_r, dq_d, log_gauss, cond, mlp_params):
    M, N, Dp, _ = xyz.shape
    B = dq_r.shape[-2]
    qr_inv = quat_conj(dq_r)
    qd_inv = quat_conj(dq_d)
    t_inv = 2.0 * quat_mul(qd_inv, quat_conj(qr_inv))[..., 1:]          # (M,N,D,B,3)
    xyz_b = quat_apply(qr_inv, xyz[..., None, :]) + t_inv               # (M,N,D,B,3)
    gauss = jnp.exp(log_gauss)                                          # (B,3)
    xyz_b = xyz_b / gauss
    dist2 = (xyz_b ** 2).sum(-1)                                        # (M,N,D,B)

    feat = xyz_b.reshape(M, N, Dp, 3 * B)                               # interleaved
    cond_e = jnp.broadcast_to(cond[:, None, None, :], (M, N, Dp, cond.shape[-1]))
    h = jnp.concatenate([feat, cond_e], axis=-1)
    w0, b0, w1, b1, wf, bf = mlp_params
    h = jax.nn.relu(h @ w0 + b0)
    h = jax.nn.relu(h @ w1 + b1)
    delta = h @ wf + bf
    delta = jax.nn.relu(delta) * 0.1
    skin = -(dist2 + delta)
    return skin, delta


# ----------------------------- main ------------------------------------------
if __name__ == "__main__":
    # shapes consistent with the forward: xyz (M,N,D,3), dq (M,N,D,B,4)
    # N*D = 1024 = TILE_P -> one tile per frame, even 2-step grid.
    M, N, Dp, B = 2, 64, 16, B_BONES
    num_frames, num_inst = 16, 2

    key = jax.random.PRNGKey(0)
    ks = jax.random.split(key, 12)

    # --- inputs ---
    xyz = 0.1 * jax.random.normal(ks[0], (M, N, Dp, 3), jnp.float32)
    qr_raw = jax.random.normal(ks[1], (M, N, Dp, B, 4), jnp.float32)
    qr = qr_raw / jnp.linalg.norm(qr_raw, axis=-1, keepdims=True)       # unit real part
    trans = 0.1 * jax.random.normal(ks[2], (M, N, Dp, B, 3), jnp.float32)
    trans_q = jnp.concatenate([jnp.zeros_like(trans[..., :1]), trans], axis=-1)
    qd = 0.5 * quat_mul(trans_q, qr)                                    # valid dual part
    frame_id = jnp.array([3, 11], dtype=jnp.int32)                      # (M,)
    inst_id = jnp.array([0, 1], dtype=jnp.int32)                        # (M,)

    # --- parameters (deterministic synthetic init) ---
    Cin = 3 * B + T_CHANNELS + INST_CHANNELS
    log_gauss = jnp.log(INIT_SCALE * jnp.ones((B, 3), jnp.float32))
    t_map_w = 0.1 * jax.random.normal(ks[3], (2 * NUM_FREQ_T + 1, T_CHANNELS), jnp.float32)
    t_map_b = 0.01 * jax.random.normal(ks[4], (T_CHANNELS,), jnp.float32)
    inst_table = 0.1 * jax.random.normal(ks[5], (num_inst, INST_CHANNELS), jnp.float32)
    w0 = 0.05 * jax.random.normal(ks[6], (Cin, W_HIDDEN), jnp.float32)
    b0 = 0.01 * jax.random.normal(ks[7], (W_HIDDEN,), jnp.float32)
    w1 = 0.05 * jax.random.normal(ks[8], (W_HIDDEN, W_HIDDEN), jnp.float32)
    b1 = 0.01 * jax.random.normal(ks[9], (W_HIDDEN,), jnp.float32)
    wf = 0.05 * jax.random.normal(ks[10], (W_HIDDEN, B), jnp.float32)
    bf = 0.01 * jax.random.normal(ks[11], (B,), jnp.float32)
    mlp_params = (w0, b0, w1, b1, wf, bf)

    # --- per-frame conditional features (time embedding + instance code) ---
    # NUM_FREQ_XYZ = 0 -> PosEmbedding is the identity on the bone coords.
    t_embed = time_embedding(frame_id, num_frames, t_map_w, t_map_b)    # (M, T_CHANNELS)
    inst_code = inst_table[inst_id]                                     # (M, INST_CHANNELS)
    cond = jnp.concatenate([t_embed, inst_code], axis=-1)               # (M, 64)
    # TODO(synk): frame_id=None / inst_id=None "mean embedding" paths and
    # symm_idx symmetrization are config branches not exercised here.

    skin, delta = skinning_field_forward(xyz, qr, qd, log_gauss, cond, mlp_params)
    skin = jax.block_until_ready(skin)
    delta = jax.block_until_ready(delta)

    skin_ref, delta_ref = reference_forward(xyz, qr, qd, log_gauss, cond, mlp_params)
    np.testing.assert_allclose(np.asarray(skin), np.asarray(skin_ref), rtol=2e-3, atol=2e-3)
    np.testing.assert_allclose(np.asarray(delta), np.asarray(delta_ref), rtol=2e-3, atol=2e-3)

    print("KERNEL_OK")
</pallas_src>

<mosaic_0001>
module attributes {stable_mosaic.version = 11 : i64} {
  func.func @skinning_kernel(%arg0: i32, %arg1: memref<3x1024xf32, #tpu.memory_space<vmem>>, %arg2: memref<32x1024xf32, #tpu.memory_space<vmem>>, %arg3: memref<32x1024xf32, #tpu.memory_space<vmem>>, %arg4: memref<24x1xf32, #tpu.memory_space<vmem>>, %arg5: memref<1x64x1xf32, #tpu.memory_space<vmem>>, %arg6: memref<64x24xf32, #tpu.memory_space<vmem>>, %arg7: memref<64x64xf32, #tpu.memory_space<vmem>>, %arg8: memref<64x1xf32, #tpu.memory_space<vmem>>, %arg9: memref<8x64xf32, #tpu.memory_space<vmem>>, %arg10: memref<8x1xf32, #tpu.memory_space<vmem>>, %arg11: memref<8x1024xf32, #tpu.memory_space<vmem>>, %arg12: memref<8x1024xf32, #tpu.memory_space<vmem>>) attributes {dimension_semantics = [#tpu.dimension_semantics<parallel>], iteration_bounds = array<i64: 2>, scalar_prefetch = 0 : i64, scratch_operands = 0 : i64, tpu.core_type = #tpu.core_type<tc>, window_params = [{transform_indices = @transform_0, window_bounds = array<i64: 3, 1024>}, {transform_indices = @transform_1, window_bounds = array<i64: 32, 1024>}, {transform_indices = @transform_2, window_bounds = array<i64: 32, 1024>}, {pipeline_mode = #tpu.pipeline_mode<synchronous>, transform_indices = @transform_3, window_bounds = array<i64: 24, 1>}, {transform_indices = @transform_4, window_bounds = array<i64: 1, 64, 1>}, {pipeline_mode = #tpu.pipeline_mode<synchronous>, transform_indices = @transform_5, window_bounds = array<i64: 64, 24>}, {pipeline_mode = #tpu.pipeline_mode<synchronous>, transform_indices = @transform_6, window_bounds = array<i64: 64, 64>}, {pipeline_mode = #tpu.pipeline_mode<synchronous>, transform_indices = @transform_7, window_bounds = array<i64: 64, 1>}, {pipeline_mode = #tpu.pipeline_mode<synchronous>, transform_indices = @transform_8, window_bounds = array<i64: 8, 64>}, {pipeline_mode = #tpu.pipeline_mode<synchronous>, transform_indices = @transform_9, window_bounds = array<i64: 8, 1>}, {transform_indices = @transform_10, window_bounds = array<i64: 8, 1024>}, {transform_indices = @transform_11, window_bounds = array<i64: 8, 1024>}]} {
    %c0 = arith.constant 0 : index
    %c0_0 = arith.constant 0 : index
    %0 = vector.load %arg1[%c0, %c0_0] : memref<3x1024xf32, #tpu.memory_space<vmem>>, vector<3x1024xf32>
    %1 = vector.extract_strided_slice %0 {offsets = [0, 0], sizes = [1, 1024], strides = [1, 1]} : vector<3x1024xf32> to vector<1x1024xf32>
    %2 = vector.shape_cast %1 : vector<1x1024xf32> to vector<1x1024xf32>
    %3 = vector.broadcast %2 : vector<1x1024xf32> to vector<8x1024xf32>
    %4 = vector.extract_strided_slice %0 {offsets = [1, 0], sizes = [1, 1024], strides = [1, 1]} : vector<3x1024xf32> to vector<1x1024xf32>
    %5 = vector.shape_cast %4 : vector<1x1024xf32> to vector<1x1024xf32>
    %6 = vector.broadcast %5 : vector<1x1024xf32> to vector<8x1024xf32>
    %7 = vector.extract_strided_slice %0 {offsets = [2, 0], sizes = [1, 1024], strides = [1, 1]} : vector<3x1024xf32> to vector<1x1024xf32>
    %8 = vector.shape_cast %7 : vector<1x1024xf32> to vector<1x1024xf32>
    %9 = vector.broadcast %8 : vector<1x1024xf32> to vector<8x1024xf32>
    %c0_1 = arith.constant 0 : index
    %c0_2 = arith.constant 0 : index
    %10 = vector.load %arg2[%c0_1, %c0_2] : memref<32x1024xf32, #tpu.memory_space<vmem>>, vector<8x1024xf32>
    %c8 = arith.constant 8 : index
    %c0_3 = arith.constant 0 : index
    %11 = vector.load %arg2[%c8, %c0_3] : memref<32x1024xf32, #tpu.memory_space<vmem>>, vector<8x1024xf32>
    %c16 = arith.constant 16 : index
    %c0_4 = arith.constant 0 : index
    %12 = vector.load %arg2[%c16, %c0_4] : memref<32x1024xf32, #tpu.memory_space<vmem>>, vector<8x1024xf32>
    %c24 = arith.constant 24 : index
    %c0_5 = arith.constant 0 : index
    %13 = vector.load %arg2[%c24, %c0_5] : memref<32x1024xf32, #tpu.memory_space<vmem>>, vector<8x1024xf32>
    %c0_6 = arith.constant 0 : index
    %c0_7 = arith.constant 0 : index
    %14 = vector.load %arg3[%c0_6, %c0_7] : memref<32x1024xf32, #tpu.memory_space<vmem>>, vector<8x1024xf32>
    %c8_8 = arith.constant 8 : index
    %c0_9 = arith.constant 0 : index
    %15 = vector.load %arg3[%c8_8, %c0_9] : memref<32x1024xf32, #tpu.memory_space<vmem>>, vector<8x1024xf32>
    %c16_10 = arith.constant 16 : index
    %c0_11 = arith.constant 0 : index
    %16 = vector.load %arg3[%c16_10, %c0_11] : memref<32x1024xf32, #tpu.memory_space<vmem>>, vector<8x1024xf32>
    %c24_12 = arith.constant 24 : index
    %c0_13 = arith.constant 0 : index
    %17 = vector.load %arg3[%c24_12, %c0_13] : memref<32x1024xf32, #tpu.memory_space<vmem>>, vector<8x1024xf32>
    %cst = arith.constant 0.000000e+00 : f32
    %18 = vector.broadcast %cst : f32 to vector<8x1024xf32>
    %19 = arith.subf %18, %11 : vector<8x1024xf32>
    %cst_14 = arith.constant 0.000000e+00 : f32
    %20 = vector.broadcast %cst_14 : f32 to vector<8x1024xf32>
    %21 = arith.subf %20, %12 : vector<8x1024xf32>
    %cst_15 = arith.constant 0.000000e+00 : f32
    %22 = vector.broadcast %cst_15 : f32 to vector<8x1024xf32>
    %23 = arith.subf %22, %13 : vector<8x1024xf32>
    %24 = arith.mulf %21, %9 : vector<8x1024xf32>
    %25 = arith.mulf %23, %6 : vector<8x1024xf32>
    %26 = arith.subf %24, %25 : vector<8x1024xf32>
    %27 = arith.mulf %23, %3 : vector<8x1024xf32>
    %28 = arith.mulf %19, %9 : vector<8x1024xf32>
    %29 = arith.subf %27, %28 : vector<8x1024xf32>
    %30 = arith.mulf %19, %6 : vector<8x1024xf32>
    %31 = arith.mulf %21, %3 : vector<8x1024xf32>
    %32 = arith.subf %30, %31 : vector<8x1024xf32>
    %33 = arith.mulf %21, %32 : vector<8x1024xf32>
    %34 = arith.mulf %23, %29 : vector<8x1024xf32>
    %35 = arith.subf %33, %34 : vector<8x1024xf32>
    %36 = arith.mulf %23, %26 : vector<8x1024xf32>
    %37 = arith.mulf %19, %32 : vector<8x1024xf32>
    %38 = arith.subf %36, %37 : vector<8x1024xf32>
    %39 = arith.mulf %19, %29 : vector<8x1024xf32>
    %40 = arith.mulf %21, %26 : vector<8x1024xf32>
    %41 = arith.subf %39, %40 : vector<8x1024xf32>
    %42 = arith.mulf %10, %26 : vector<8x1024xf32>
    %43 = arith.addf %42, %35 : vector<8x1024xf32>
    %cst_16 = arith.constant 2.000000e+00 : f32
    %44 = vector.broadcast %cst_16 : f32 to vector<8x1024xf32>
    %45 = arith.mulf %44, %43 : vector<8x1024xf32>
    %46 = arith.addf %3, %45 : vector<8x1024xf32>
    %47 = arith.mulf %10, %29 : vector<8x1024xf32>
    %48 = arith.addf %47, %38 : vector<8x1024xf32>
    %cst_17 = arith.constant 2.000000e+00 : f32
    %49 = vector.broadcast %cst_17 : f32 to vector<8x1024xf32>
    %50 = arith.mulf %49, %48 : vector<8x1024xf32>
    %51 = arith.addf %6, %50 : vector<8x1024xf32>
    %52 = arith.mulf %10, %32 : vector<8x1024xf32>
    %53 = arith.addf %52, %41 : vector<8x1024xf32>
    %cst_18 = arith.constant 2.000000e+00 : f32
    %54 = vector.broadcast %cst_18 : f32 to vector<8x1024xf32>
    %55 = arith.mulf %54, %53 : vector<8x1024xf32>
    %56 = arith.addf %9, %55 : vector<8x1024xf32>
    %57 = arith.mulf %14, %11 : vector<8x1024xf32>
    %58 = arith.mulf %15, %10 : vector<8x1024xf32>
    %59 = arith.subf %57, %58 : vector<8x1024xf32>
    %60 = arith.mulf %16, %13 : vector<8x1024xf32>
    %61 = arith.subf %59, %60 : vector<8x1024xf32>
    %62 = arith.mulf %17, %12 : vector<8x1024xf32>
    %63 = arith.addf %61, %62 : vector<8x1024xf32>
    %cst_19 = arith.constant 2.000000e+00 : f32
    %64 = vector.broadcast %cst_19 : f32 to vector<8x1024xf32>
    %65 = arith.mulf %64, %63 : vector<8x1024xf32>
    %66 = arith.mulf %14, %12 : vector<8x1024xf32>
    %67 = arith.mulf %15, %13 : vector<8x1024xf32>
    %68 = arith.addf %66, %67 : vector<8x1024xf32>
    %69 = arith.mulf %16, %10 : vector<8x1024xf32>
    %70 = arith.subf %68, %69 : vector<8x1024xf32>
    %71 = arith.mulf %17, %11 : vector<8x1024xf32>
    %72 = arith.subf %70, %71 : vector<8x1024xf32>
    %cst_20 = arith.constant 2.000000e+00 : f32
    %73 = vector.broadcast %cst_20 : f32 to vector<8x1024xf32>
    %74 = arith.mulf %73, %72 : vector<8x1024xf32>
    %75 = arith.mulf %14, %13 : vector<8x1024xf32>
    %76 = arith.mulf %15, %12 : vector<8x1024xf32>
    %77 = arith.subf %75, %76 : vector<8x1024xf32>
    %78 = arith.mulf %16, %11 : vector<8x1024xf32>
    %79 = arith.addf %77, %78 : vector<8x1024xf32>
    %80 = arith.mulf %17, %10 : vector<8x1024xf32>
    %81 = arith.subf %79, %80 : vector<8x1024xf32>
    %cst_21 = arith.constant 2.000000e+00 : f32
    %82 = vector.broadcast %cst_21 : f32 to vector<8x1024xf32>
    %83 = arith.mulf %82, %81 : vector<8x1024xf32>
    %c0_22 = arith.constant 0 : index
    %c0_23 = arith.constant 0 : index
    %84 = vector.load %arg4[%c0_22, %c0_23] : memref<24x1xf32, #tpu.memory_space<vmem>>, vector<8x1xf32>
    %c8_24 = arith.constant 8 : index
    %c0_25 = arith.constant 0 : index
    %85 = vector.load %arg4[%c8_24, %c0_25] : memref<24x1xf32, #tpu.memory_space<vmem>>, vector<8x1xf32>
    %c16_26 = arith.constant 16 : index
    %c0_27 = arith.constant 0 : index
    %86 = vector.load %arg4[%c16_26, %c0_27] : memref<24x1xf32, #tpu.memory_space<vmem>>, vector<8x1xf32>
    %87 = arith.addf %46, %65 : vector<8x1024xf32>
    %88 = vector.broadcast %84 : vector<8x1xf32> to vector<8x1024xf32>
    %89 = arith.mulf %87, %88 : vector<8x1024xf32>
    %90 = arith.addf %51, %74 : vector<8x1024xf32>
    %91 = vector.broadcast %85 : vector<8x1xf32> to vector<8x1024xf32>
    %92 = arith.mulf %90, %91 : vector<8x1024xf32>
    %93 = arith.addf %56, %83 : vector<8x1024xf32>
    %94 = vector.broadcast %86 : vector<8x1xf32> to vector<8x1024xf32>
    %95 = arith.mulf %93, %94 : vector<8x1024xf32>
    %96 = arith.mulf %89, %89 : vector<8x1024xf32>
    %97 = arith.mulf %92, %92 : vector<8x1024xf32>
    %98 = arith.addf %96, %97 : vector<8x1024xf32>
    %99 = arith.mulf %95, %95 : vector<8x1024xf32>
    %100 = arith.addf %98, %99 : vector<8x1024xf32>
    %101 = tpu.concatenate %89, %92, %95 in 0 : vector<8x1024xf32>, vector<8x1024xf32>, vector<8x1024xf32> -> vector<24x1024xf32>
    %c0_28 = arith.constant 0 : index
    %c0_29 = arith.constant 0 : index
    %102 = vector.load %arg6[%c0_28, %c0_29] : memref<64x24xf32, #tpu.memory_space<vmem>>, vector<64x24xf32>
    %cst_30 = arith.constant dense<0.000000e+00> : vector<64x1024xf32>
    %103 = tpu.matmul %102, %101, %cst_30 {dimension_numbers = #tpu.dot_dimension_numbers<[1], [0], [0], [1], [0, 0, 1, 1], [], []>} : vector<64x24xf32>, vector<24x1024xf32>, vector<64x1024xf32> -> vector<64x1024xf32>
    %c0_31 = arith.constant 0 : index
    %c0_32 = arith.constant 0 : index
    %c0_33 = arith.constant 0 : index
    %104 = vector.load %arg5[%c0_31, %c0_32, %c0_33] : memref<1x64x1xf32, #tpu.memory_space<vmem>>, vector<1x64x1xf32>
    %105 = vector.shape_cast %104 : vector<1x64x1xf32> to vector<64x1xf32>
    %106 = vector.broadcast %105 : vector<64x1xf32> to vector<64x1024xf32>
    %107 = arith.addf %103, %106 : vector<64x1024xf32>
    %cst_34 = arith.constant 0.000000e+00 : f32
    %108 = vector.broadcast %cst_34 : f32 to vector<64x1024xf32>
    %109 = arith.maximumf %107, %108 : vector<64x1024xf32>
    %c0_35 = arith.constant 0 : index
    %c0_36 = arith.constant 0 : index
    %110 = vector.load %arg7[%c0_35, %c0_36] : memref<64x64xf32, #tpu.memory_space<vmem>>, vector<64x64xf32>
    %cst_37 = arith.constant dense<0.000000e+00> : vector<64x1024xf32>
    %111 = tpu.matmul %110, %109, %cst_37 {dimension_numbers = #tpu.dot_dimension_numbers<[1], [0], [0], [1], [0, 0, 1, 1], [], []>} : vector<64x64xf32>, vector<64x1024xf32>, vector<64x1024xf32> -> vector<64x1024xf32>
    %c0_38 = arith.constant 0 : index
    %c0_39 = arith.constant 0 : index
    %112 = vector.load %arg8[%c0_38, %c0_39] : memref<64x1xf32, #tpu.memory_space<vmem>>, vector<64x1xf32>
    %113 = vector.broadcast %112 : vector<64x1xf32> to vector<64x1024xf32>
    %114 = arith.addf %111, %113 : vector<64x1024xf32>
    %cst_40 = arith.constant 0.000000e+00 : f32
    %115 = vector.broadcast %cst_40 : f32 to vector<64x1024xf32>
    %116 = arith.maximumf %114, %115 : vector<64x1024xf32>
    %c0_41 = arith.constant 0 : index
    %c0_42 = arith.constant 0 : index
    %117 = vector.load %arg9[%c0_41, %c0_42] : memref<8x64xf32, #tpu.memory_space<vmem>>, vector<8x64xf32>
    %cst_43 = arith.constant dense<0.000000e+00> : vector<8x1024xf32>
    %118 = tpu.matmul %117, %116, %cst_43 {dimension_numbers = #tpu.dot_dimension_numbers<[1], [0], [0], [1], [0, 0, 1, 1], [], []>} : vector<8x64xf32>, vector<64x1024xf32>, vector<8x1024xf32> -> vector<8x1024xf32>
    %c0_44 = arith.constant 0 : index
    %c0_45 = arith.constant 0 : index
    %119 = vector.load %arg10[%c0_44, %c0_45] : memref<8x1xf32, #tpu.memory_space<vmem>>, vector<8x1xf32>
    %120 = vector.broadcast %119 : vector<8x1xf32> to vector<8x1024xf32>
    %121 = arith.addf %118, %120 : vector<8x1024xf32>
    %cst_46 = arith.constant 0.000000e+00 : f32
    %122 = vector.broadcast %cst_46 : f32 to vector<8x1024xf32>
    %123 = arith.maximumf %121, %122 : vector<8x1024xf32>
    %cst_47 = arith.constant 1.000000e-01 : f32
    %124 = vector.broadcast %cst_47 : f32 to vector<8x1024xf32>
    %125 = arith.mulf %123, %124 : vector<8x1024xf32>
    %c0_48 = arith.constant 0 : index
    %c0_49 = arith.constant 0 : index
    %126 = vector.load %arg12[%c0_48, %c0_49] : memref<8x1024xf32, #tpu.memory_space<vmem>>, vector<8x1024xf32>
    tpu.vector_store %arg12[%c0_48, %c0_49], %125 {strides = array<i32>} : memref<8x1024xf32, #tpu.memory_space<vmem>>, vector<8x1024xf32>,
    %127 = arith.addf %100, %125 : vector<8x1024xf32>
    %cst_50 = arith.constant 0.000000e+00 : f32
    %128 = vector.broadcast %cst_50 : f32 to vector<8x1024xf32>
    %129 = arith.subf %128, %127 : vector<8x1024xf32>
    %c0_51 = arith.constant 0 : index
    %c0_52 = arith.constant 0 : index
    %130 = vector.load %arg11[%c0_51, %c0_52] : memref<8x1024xf32, #tpu.memory_space<vmem>>, vector<8x1024xf32>
    tpu.vector_store %arg11[%c0_51, %c0_52], %129 {strides = array<i32>} : memref<8x1024xf32, #tpu.memory_space<vmem>>, vector<8x1024xf32>,
    return
  }
  func.func @transform_0(%arg0: i32) -> (i32, i32) {
    %c0_i32 = arith.constant 0 : i32
    %c0_i32_0 = arith.constant 0 : i32
    return %c0_i32, %arg0 : i32, i32
  }
  func.func @transform_1(%arg0: i32) -> (i32, i32) {
    %c0_i32 = arith.constant 0 : i32
    %c0_i32_0 = arith.constant 0 : i32
    return %c0_i32, %arg0 : i32, i32
  }
  func.func @transform_2(%arg0: i32) -> (i32, i32) {
    %c0_i32 = arith.constant 0 : i32
    %c0_i32_0 = arith.constant 0 : i32
    return %c0_i32, %arg0 : i32, i32
  }
  func.func @transform_3(%arg0: i32) -> (i32, i32) {
    %c0_i32 = arith.constant 0 : i32
    %c0_i32_0 = arith.constant 0 : i32
    %c0_i32_1 = arith.constant 0 : i32
    return %c0_i32, %c0_i32_0 : i32, i32
  }
  func.func @transform_4(%arg0: i32) -> (i32, i32, i32) {
    %c0_i32 = arith.constant 0 : i32
    %c0_i32_0 = arith.constant 0 : i32
    %c0_i32_1 = arith.constant 0 : i32
    return %arg0, %c0_i32, %c0_i32_0 : i32, i32, i32
  }
  func.func @transform_5(%arg0: i32) -> (i32, i32) {
    %c0_i32 = arith.constant 0 : i32
    %c0_i32_0 = arith.constant 0 : i32
    %c0_i32_1 = arith.constant 0 : i32
    return %c0_i32, %c0_i32_0 : i32, i32
  }
  func.func @transform_6(%arg0: i32) -> (i32, i32) {
    %c0_i32 = arith.constant 0 : i32
    %c0_i32_0 = arith.constant 0 : i32
    %c0_i32_1 = arith.constant 0 : i32
    return %c0_i32, %c0_i32_0 : i32, i32
  }
  func.func @transform_7(%arg0: i32) -> (i32, i32) {
    %c0_i32 = arith.constant 0 : i32
    %c0_i32_0 = arith.constant 0 : i32
    %c0_i32_1 = arith.constant 0 : i32
    return %c0_i32, %c0_i32_0 : i32, i32
  }
  func.func @transform_8(%arg0: i32) -> (i32, i32) {
    %c0_i32 = arith.constant 0 : i32
    %c0_i32_0 = arith.constant 0 : i32
    %c0_i32_1 = arith.constant 0 : i32
    return %c0_i32, %c0_i32_0 : i32, i32
  }
  func.func @transform_9(%arg0: i32) -> (i32, i32) {
    %c0_i32 = arith.constant 0 : i32
    %c0_i32_0 = arith.constant 0 : i32
    %c0_i32_1 = arith.constant 0 : i32
    return %c0_i32, %c0_i32_0 : i32, i32
  }
  func.func @transform_10(%arg0: i32) -> (i32, i32) {
    %c0_i32 = arith.constant 0 : i32
    %c0_i32_0 = arith.constant 0 : i32
    return %c0_i32, %arg0 : i32, i32
  }
  func.func @transform_11(%arg0: i32) -> (i32, i32) {
    %c0_i32 = arith.constant 0 : i32
    %c0_i32_0 = arith.constant 0 : i32
    return %c0_i32, %arg0 : i32, i32
  }
}

</mosaic_0001>

<llo_original>
// kernel: tpu_custom_call.1
$region0: #{tpu_custom_call.1}
  #allocation0 [shape = 'u32[]', space=smem, size = 0x4, offset = 0x4, fixed_abs, tag = 'smem constant byte address 0x4 - core index']
  #allocation1 [shape = 'u32[72,128]{1,0:T(1,128)}', space=vmem, size = 0x9000, scoped, tag = 'internal scratch']
  %s0 = inlined_call_operand.vmem [shape: f32[3,2048], index: 0, kind: input, shape index: {}]
  %s1 = inlined_call_operand.hbm [shape: f32[32,2048], index: 1, kind: input, shape index: {}]
  %s2 = inlined_call_operand.hbm [shape: f32[32,2048], index: 2, kind: input, shape index: {}]
  %s3 = inlined_call_operand.vmem [shape: f32[24,1], index: 3, kind: input, shape index: {}]
  %s4 = inlined_call_operand.vmem [shape: f32[2,64,1], index: 4, kind: input, shape index: {}]
  %s5 = inlined_call_operand.vmem [shape: f32[64,24], index: 5, kind: input, shape index: {}]
  %s6 = inlined_call_operand.vmem [shape: f32[64,64], index: 6, kind: input, shape index: {}]
  %s7 = inlined_call_operand.vmem [shape: f32[64,1], index: 7, kind: input, shape index: {}]
  %s8 = inlined_call_operand.vmem [shape: f32[8,64], index: 8, kind: input, shape index: {}]
  %s9 = inlined_call_operand.vmem [shape: f32[8,1], index: 9, kind: input, shape index: {}]
  %s10 = inlined_call_operand.hbm [shape: f32[8,2048], index: 10, kind: output, shape index: {0}]
  %s11 = inlined_call_operand.hbm [shape: f32[8,2048], index: 11, kind: output, shape index: {1}]
  %12 = xla_tuple %s10, %s11
  %s13 = sld [smem:[#allocation0]]
  $region89: #{tpu_custom_call.1} parent=0
    _
  %s15 = ssub.s32 1, %s13
  %s16 = scalar_select 0, %s15, %s13
  $region1: #{tpu_custom_call.1} parent=0
    #allocation2 [shape = 'u8[262144]{0}', space=vmem, size = 0x40000, scoped, tag = 'input window, operand 1']
    #allocation3 [shape = 's32[2]{0}', space=sflag, size = 0x8, scoped, tag = 'scoped memory for tpu_custom_call.1']
    #allocation4 [shape = 's32[2]{0}', space=sflag, size = 0x8, scoped, tag = 'scoped memory for tpu_custom_call.1']
    #allocation5 [shape = 'u8[262144]{0}', space=vmem, size = 0x40000, scoped, tag = 'input window, operand 2']
    #allocation6 [shape = 's32[2]{0}', space=sflag, size = 0x8, scoped, tag = 'scoped memory for tpu_custom_call.1']
    #allocation7 [shape = 'u8[65536]{0}', space=vmem, size = 0x10000, scoped, tag = 'output window, operand 0']
    #allocation8 [shape = 'u8[65536]{0}', space=vmem, size = 0x10000, scoped, tag = 'output window, operand 1']
    #allocation9 [shape = 's32[2]{0}', space=sflag, size = 0x8, scoped, tag = 'scoped memory for tpu_custom_call.1']
    %17 = vsyncpa [#allocation3], 0
    %s18 = scalar_lea.sflag [#allocation3], 1
    %19 = vsyncpa %s18, 0
    %20 = vsyncpa [#allocation6], 0
    %s21 = scalar_lea.sflag [#allocation6], 1
    %22 = vsyncpa %s21, 0
    %23 = vsyncpa [#allocation4], 0
    %s24 = scalar_lea.sflag [#allocation4], 1
    %25 = vsyncpa %s24, 0
    %26 = vsyncpa [#allocation9], 0
    %s27 = scalar_lea.sflag [#allocation9], 1
    %28 = vsyncpa %s27, 0
    loop: start=0, step=1, limit=4
    $region2: #{tpu_custom_call.1} parent=1 // loop_pre_header
      _
    $region3: #{tpu_custom_call.1} parent=1 // loop_header
      %s30 = sphi 0, %s34
      %p31 = scmp.ge.s32.totalorder %s30, 4
      %s40 = sphi 0, %s42
      %s43 = sphi 0, %s40
      %s44 = sphi 0, %s43
      %s60 = sphi 0, %s44
      %s66 = sphi 0, %s68
      %s69 = sphi 0, %s66
      %s70 = sphi 0, %s69
      %s86 = sphi 0, %s70
      %s92 = sphi 0, %s94
      %s95 = sphi 0, %s92
      %s96 = sphi 0, %s95
      %s112 = sphi 0, %s96
      %s116 = sphi 0, %s116
      %s118 = sphi 0, %s116
      %s119 = sphi 0, %s118
      %s133 = sphi 0, %s119
      %s139 = sphi 0, %s141
      %s142 = sphi 0, %s139
      %s143 = sphi 0, %s142
      %s159 = sphi 0, %s143
      %s163 = sphi 0, %s163
      %s165 = sphi 0, %s163
      %s166 = sphi 0, %s165
      %s180 = sphi 0, %s166
      %s184 = sphi 0, %s184
      %s186 = sphi 0, %s184
      %s187 = sphi 0, %s186
      %s201 = sphi 0, %s187
      %s205 = sphi 0, %s205
      %s207 = sphi 0, %s205
      %s208 = sphi 0, %s207
      %s222 = sphi 0, %s208
      %s226 = sphi 0, %s226
      %s228 = sphi 0, %s226
      %s229 = sphi 0, %s228
      %s243 = sphi 0, %s229
      %s247 = sphi 0, %s247
      %s249 = sphi 0, %s247
      %s250 = sphi 0, %s249
      %s264 = sphi 0, %s250
      %s270 = sphi 0, %s272
      %s273 = sphi 0, %s270
      %s274 = sphi 0, %s273
      %s290 = sphi 0, %s274
      %s296 = sphi 0, %s298
      %s299 = sphi 0, %s296
      %s300 = sphi 0, %s299
      %s316 = sphi 0, %s300
    $region4: #{tpu_custom_call.1} parent=1 // loop_header_branch
      %33 = sbr.rel (%p31) target = $region8
    $region5: #{tpu_custom_call.1} parent=1 // loop_body
      %s35 = ssub.s32 %s30, 1
      %s36 = ssub.s32 %s30, 2
      %s37 = sadd.s32 %s30, 1
      %s38 = ssub.s32 %s30, %s37
      %p39 = scmp.eq.s32.totalorder %s38, 0
      %s41 = sadd.s32 %s40, 1
      %s42 = scalar_select %p39, %s40, %s41
      %p45 = pneg %p39
      %p46 = scmp.eq.s32.totalorder %s30, 1
      %p47 = por %p45, %p46
      %p48 = scmp.ne.s32.totalorder %s40, %s43
      %p49 = scmp.eq.s32.totalorder %s30, 0
      %p50 = por %p48, %p49
      %p51 = scmp.ne.s32.totalorder %s40, %s43
      %p52 = scmp.eq.s32.totalorder %s35, 1
      %p53 = por %p51, %p52
      %p54 = scmp.ne.s32.totalorder %s43, %s44
      %p55 = scmp.eq.s32.totalorder %s35, 0
      %p56 = por %p54, %p55
      %p57 = scmp.ne.s32.totalorder %s43, %s44
      %p58 = scmp.eq.s32.totalorder %s36, 1
      %p59 = por %p57, %p58
      %p61 = scmp.ne.s32.totalorder %s44, %s60
      %p62 = scmp.eq.s32.totalorder %s36, 0
      %p63 = por %p61, %p62
      %s64 = ssub.s32 %s30, %s37
      %p65 = scmp.eq.s32.totalorder %s64, 0
      %s67 = sadd.s32 %s66, 1
      %s68 = scalar_select %p65, %s66, %s67
      %p71 = pneg %p65
      %p72 = scmp.eq.s32.totalorder %s30, 1
      %p73 = por %p71, %p72
      %p74 = scmp.ne.s32.totalorder %s66, %s69
      %p75 = scmp.eq.s32.totalorder %s30, 0
      %p76 = por %p74, %p75
      %p77 = scmp.ne.s32.totalorder %s66, %s69
      %p78 = scmp.eq.s32.totalorder %s35, 1
      %p79 = por %p77, %p78
      %p80 = scmp.ne.s32.totalorder %s69, %s70
      %p81 = scmp.eq.s32.totalorder %s35, 0
      %p82 = por %p80, %p81
      %p83 = scmp.ne.s32.totalorder %s69, %s70
      %p84 = scmp.eq.s32.totalorder %s36, 1
      %p85 = por %p83, %p84
      %p87 = scmp.ne.s32.totalorder %s70, %s86
      %p88 = scmp.eq.s32.totalorder %s36, 0
      %p89 = por %p87, %p88
      %s90 = ssub.s32 %s30, %s37
      %p91 = scmp.eq.s32.totalorder %s90, 0
      %s93 = sadd.s32 %s92, 1
      %s94 = scalar_select %p91, %s92, %s93
      %p97 = pneg %p91
      %p98 = scmp.eq.s32.totalorder %s30, 1
      %p99 = por %p97, %p98
      %p100 = scmp.ne.s32.totalorder %s92, %s95
      %p101 = scmp.eq.s32.totalorder %s30, 0
      %p102 = por %p100, %p101
      %p103 = scmp.ne.s32.totalorder %s92, %s95
      %p104 = scmp.eq.s32.totalorder %s35, 1
      %p105 = por %p103, %p104
      %p106 = scmp.ne.s32.totalorder %s95, %s96
      %p107 = scmp.eq.s32.totalorder %s35, 0
      %p108 = por %p106, %p107
      %p109 = scmp.ne.s32.totalorder %s95, %s96
      %p110 = scmp.eq.s32.totalorder %s36, 1
      %p111 = por %p109, %p110
      %p113 = scmp.ne.s32.totalorder %s96, %s112
      %p114 = scmp.eq.s32.totalorder %s36, 0
      %p115 = por %p113, %p114
      %s117 = sadd.s32 %s116, 1
      %p120 = scmp.eq.s32.totalorder %s30, 1
      %p121 = scmp.ne.s32.totalorder %s116, %s118
      %p122 = scmp.eq.s32.totalorder %s30, 0
      %p123 = por %p121, %p122
      %p124 = scmp.ne.s32.totalorder %s116, %s118
      %p125 = scmp.eq.s32.totalorder %s35, 1
      %p126 = por %p124, %p125
      %p127 = scmp.ne.s32.totalorder %s118, %s119
      %p128 = scmp.eq.s32.totalorder %s35, 0
      %p129 = por %p127, %p128
      %p130 = scmp.ne.s32.totalorder %s118, %s119
      %p131 = scmp.eq.s32.totalorder %s36, 1
      %p132 = por %p130, %p131
      %p134 = scmp.ne.s32.totalorder %s119, %s133
      %p135 = scmp.eq.s32.totalorder %s36, 0
      %p136 = por %p134, %p135
      %s137 = ssub.s32 %s30, %s37
      %p138 = scmp.eq.s32.totalorder %s137, 0
      %s140 = sadd.s32 %s139, 1
      %s141 = scalar_select %p138, %s139, %s140
      %p144 = pneg %p138
      %p145 = scmp.eq.s32.totalorder %s30, 1
      %p146 = por %p144, %p145
      %p147 = scmp.ne.s32.totalorder %s139, %s142
      %p148 = scmp.eq.s32.totalorder %s30, 0
      %p149 = por %p147, %p148
      %p150 = scmp.ne.s32.totalorder %s139, %s142
      %p151 = scmp.eq.s32.totalorder %s35, 1
      %p152 = por %p150, %p151
      %p153 = scmp.ne.s32.totalorder %s142, %s143
      %p154 = scmp.eq.s32.totalorder %s35, 0
      %p155 = por %p153, %p154
      %p156 = scmp.ne.s32.totalorder %s142, %s143
      %p157 = scmp.eq.s32.totalorder %s36, 1
      %p158 = por %p156, %p157
      %p160 = scmp.ne.s32.totalorder %s143, %s159
      %p161 = scmp.eq.s32.totalorder %s36, 0
      %p162 = por %p160, %p161
      %s164 = sadd.s32 %s163, 1
      %p167 = scmp.eq.s32.totalorder %s30, 1
      %p168 = scmp.ne.s32.totalorder %s163, %s165
      %p169 = scmp.eq.s32.totalorder %s30, 0
      %p170 = por %p168, %p169
      %p171 = scmp.ne.s32.totalorder %s163, %s165
      %p172 = scmp.eq.s32.totalorder %s35, 1
      %p173 = por %p171, %p172
      %p174 = scmp.ne.s32.totalorder %s165, %s166
      %p175 = scmp.eq.s32.totalorder %s35, 0
      %p176 = por %p174, %p175
      %p177 = scmp.ne.s32.totalorder %s165, %s166
      %p178 = scmp.eq.s32.totalorder %s36, 1
      %p179 = por %p177, %p178
      %p181 = scmp.ne.s32.totalorder %s166, %s180
      %p182 = scmp.eq.s32.totalorder %s36, 0
      %p183 = por %p181, %p182
      %s185 = sadd.s32 %s184, 1
      %p188 = scmp.eq.s32.totalorder %s30, 1
      %p189 = scmp.ne.s32.totalorder %s184, %s186
      %p190 = scmp.eq.s32.totalorder %s30, 0
      %p191 = por %p189, %p190
      %p192 = scmp.ne.s32.totalorder %s184, %s186
      %p193 = scmp.eq.s32.totalorder %s35, 1
      %p194 = por %p192, %p193
      %p195 = scmp.ne.s32.totalorder %s186, %s187
      %p196 = scmp.eq.s32.totalorder %s35, 0
      %p197 = por %p195, %p196
      %p198 = scmp.ne.s32.totalorder %s186, %s187
      %p199 = scmp.eq.s32.totalorder %s36, 1
      %p200 = por %p198, %p199
      %p202 = scmp.ne.s32.totalorder %s187, %s201
      %p203 = scmp.eq.s32.totalorder %s36, 0
      %p204 = por %p202, %p203
      %s206 = sadd.s32 %s205, 1
      %p209 = scmp.eq.s32.totalorder %s30, 1
      %p210 = scmp.ne.s32.totalorder %s205, %s207
      %p211 = scmp.eq.s32.totalorder %s30, 0
      %p212 = por %p210, %p211
      %p213 = scmp.ne.s32.totalorder %s205, %s207
      %p214 = scmp.eq.s32.totalorder %s35, 1
      %p215 = por %p213, %p214
      %p216 = scmp.ne.s32.totalorder %s207, %s208
      %p217 = scmp.eq.s32.totalorder %s35, 0
      %p218 = por %p216, %p217
      %p219 = scmp.ne.s32.totalorder %s207, %s208
      %p220 = scmp.eq.s32.totalorder %s36, 1
      %p221 = por %p219, %p220
      %p223 = scmp.ne.s32.totalorder %s208, %s222
      %p224 = scmp.eq.s32.totalorder %s36, 0
      %p225 = por %p223, %p224
      %s227 = sadd.s32 %s226, 1
      %p230 = scmp.eq.s32.totalorder %s30, 1
      %p231 = scmp.ne.s32.totalorder %s226, %s228
      %p232 = scmp.eq.s32.totalorder %s30, 0
      %p233 = por %p231, %p232
      %p234 = scmp.ne.s32.totalorder %s226, %s228
      %p235 = scmp.eq.s32.totalorder %s35, 1
      %p236 = por %p234, %p235
      %p237 = scmp.ne.s32.totalorder %s228, %s229
      %p238 = scmp.eq.s32.totalorder %s35, 0
      %p239 = por %p237, %p238
      %p240 = scmp.ne.s32.totalorder %s228, %s229
      %p241 = scmp.eq.s32.totalorder %s36, 1
      %p242 = por %p240, %p241
      %p244 = scmp.ne.s32.totalorder %s229, %s243
      %p245 = scmp.eq.s32.totalorder %s36, 0
      %p246 = por %p244, %p245
      %s248 = sadd.s32 %s247, 1
      %p251 = scmp.eq.s32.totalorder %s30, 1
      %p252 = scmp.ne.s32.totalorder %s247, %s249
      %p253 = scmp.eq.s32.totalorder %s30, 0
      %p254 = por %p252, %p253
      %p255 = scmp.ne.s32.totalorder %s247, %s249
      %p256 = scmp.eq.s32.totalorder %s35, 1
      %p257 = por %p255, %p256
      %p258 = scmp.ne.s32.totalorder %s249, %s250
      %p259 = scmp.eq.s32.totalorder %s35, 0
      %p260 = por %p258, %p259
      %p261 = scmp.ne.s32.totalorder %s249, %s250
      %p262 = scmp.eq.s32.totalorder %s36, 1
      %p263 = por %p261, %p262
      %p265 = scmp.ne.s32.totalorder %s250, %s264
      %p266 = scmp.eq.s32.totalorder %s36, 0
      %p267 = por %p265, %p266
      %s268 = ssub.s32 %s30, %s37
      %p269 = scmp.eq.s32.totalorder %s268, 0
      %s271 = sadd.s32 %s270, 1
      %s272 = scalar_select %p269, %s270, %s271
      %p275 = pneg %p269
      %p276 = scmp.eq.s32.totalorder %s30, 1
      %p277 = por %p275, %p276
      %p278 = scmp.ne.s32.totalorder %s270, %s273
      %p279 = scmp.eq.s32.totalorder %s30, 0
      %p280 = por %p278, %p279
      %p281 = scmp.ne.s32.totalorder %s270, %s273
      %p282 = scmp.eq.s32.totalorder %s35, 1
      %p283 = por %p281, %p282
      %p284 = scmp.ne.s32.totalorder %s273, %s274
      %p285 = scmp.eq.s32.totalorder %s35, 0
      %p286 = por %p284, %p285
      %p287 = scmp.ne.s32.totalorder %s273, %s274
      %p288 = scmp.eq.s32.totalorder %s36, 1
      %p289 = por %p287, %p288
      %p291 = scmp.ne.s32.totalorder %s274, %s290
      %p292 = scmp.eq.s32.totalorder %s36, 0
      %p293 = por %p291, %p292
      %s294 = ssub.s32 %s30, %s37
      %p295 = scmp.eq.s32.totalorder %s294, 0
      %s297 = sadd.s32 %s296, 1
      %s298 = scalar_select %p295, %s296, %s297
      %p301 = pneg %p295
      %p302 = scmp.eq.s32.totalorder %s30, 1
      %p303 = por %p301, %p302
      %p304 = scmp.ne.s32.totalorder %s296, %s299
      %p305 = scmp.eq.s32.totalorder %s30, 0
      %p306 = por %p304, %p305
      %p307 = scmp.ne.s32.totalorder %s296, %s299
      %p308 = scmp.eq.s32.totalorder %s35, 1
      %p309 = por %p307, %p308
      %p310 = scmp.ne.s32.totalorder %s299, %s300
      %p311 = scmp.eq.s32.totalorder %s35, 0
      %p312 = por %p310, %p311
      %p313 = scmp.ne.s32.totalorder %s299, %s300
      %p314 = scmp.eq.s32.totalorder %s36, 1
      %p315 = por %p313, %p314
      %p317 = scmp.ne.s32.totalorder %s300, %s316
      %p318 = scmp.eq.s32.totalorder %s36, 0
      %p319 = por %p317, %p318
      %p320 = scmp.le.s32.totalorder 1, %s30
      %p321 = scmp.lt.s32.totalorder %s30, 3
      %p322 = pnand %p320, %p321
      %p323 = pneg %p322
      // Predicated region
      $region9: #{tpu_custom_call.1} parent=5 // pred_check
        _
      $region10: #{tpu_custom_call.1} parent=5 // pred_check_branch
        %325 = sbr.rel (%p322) target = $region12
      $region11: #{tpu_custom_call.1} parent=5 // pred_region
        %s326 = ssub.s32 %s30, 1
        // Predicated region
        $region13: #{tpu_custom_call.1} parent=11 // pred_check
          %p327 = pneg %p129
        $region14: #{tpu_custom_call.1} parent=11 // pred_check_branch
          %329 = sbr.rel (%p327) target = $region16
        $region15: #{tpu_custom_call.1} parent=11 // pred_region
          _
        $region16: #{tpu_custom_call.1} parent=11 // pred_fallthru
          _
        // Predicated region
        $region17: #{tpu_custom_call.1} parent=11 // pred_check
          %p330 = pneg %p176
        $region18: #{tpu_custom_call.1} parent=11 // pred_check_branch
          %332 = sbr.rel (%p330) target = $region20
        $region19: #{tpu_custom_call.1} parent=11 // pred_region
          _
        $region20: #{tpu_custom_call.1} parent=11 // pred_fallthru
          _
        // Predicated region
        $region21: #{tpu_custom_call.1} parent=11 // pred_check
          %p333 = pneg %p197
        $region22: #{tpu_custom_call.1} parent=11 // pred_check_branch
          %335 = sbr.rel (%p333) target = $region24
        $region23: #{tpu_custom_call.1} parent=11 // pred_region
          _
        $region24: #{tpu_custom_call.1} parent=11 // pred_fallthru
          _
        // Predicated region
        $region25: #{tpu_custom_call.1} parent=11 // pred_check
          %p336 = pneg %p218
        $region26: #{tpu_custom_call.1} parent=11 // pred_check_branch
          %338 = sbr.rel (%p336) target = $region28
        $region27: #{tpu_custom_call.1} parent=11 // pred_region
          _
        $region28: #{tpu_custom_call.1} parent=11 // pred_fallthru
          _
        // Predicated region
        $region29: #{tpu_custom_call.1} parent=11 // pred_check
          %p339 = pneg %p239
        $region30: #{tpu_custom_call.1} parent=11 // pred_check_branch
          %341 = sbr.rel (%p339) target = $region32
        $region31: #{tpu_custom_call.1} parent=11 // pred_region
          _
        $region32: #{tpu_custom_call.1} parent=11 // pred_fallthru
          _
        // Predicated region
        $region33: #{tpu_custom_call.1} parent=11 // pred_check
          %p342 = pneg %p260
        $region34: #{tpu_custom_call.1} parent=11 // pred_check_branch
          %344 = sbr.rel (%p342) target = $region36
        $region35: #{tpu_custom_call.1} parent=11 // pred_region
          _
        $region36: #{tpu_custom_call.1} parent=11 // pred_fallthru
          _
      $region12: #{tpu_custom_call.1} parent=5 // pred_fallthru
        _
      %p345 = scmp.lt.s32.totalorder %s30, 2
      // Predicated region
      $region37: #{tpu_custom_call.1} parent=5 // pred_check
        %p346 = pneg %p345
      $region38: #{tpu_custom_call.1} parent=5 // pred_check_branch
        %348 = sbr.rel (%p346) target = $region40
      $region39: #{tpu_custom_call.1} parent=5 // pred_region
        // Predicated region
        $region41: #{tpu_custom_call.1} parent=39 // pred_check
          %p349 = pneg %p50
        $region42: #{tpu_custom_call.1} parent=39 // pred_check_branch
          %351 = sbr.rel (%p349) target = $region44
        $region43: #{tpu_custom_call.1} parent=39 // pred_region
          %s352 = smul.u32 8, %s30
          %p353 = scmp.lt.s32.totalorder %s352, 15
          %s354 = scalar_select %p353, %s352, 15
          %s355 = smul.addr %s354, 4
          %s356 = scalar_lea.vmem %s0, %s355
          %s357 = smul.u32 8, %s30
        $region44: #{tpu_custom_call.1} parent=39 // pred_fallthru
          _
        // Predicated region
        $region45: #{tpu_custom_call.1} parent=39 // pred_check
          %p358 = pneg %p76
        $region46: #{tpu_custom_call.1} parent=39 // pred_check_branch
          %360 = sbr.rel (%p358) target = $region48
        $region47: #{tpu_custom_call.1} parent=39 // pred_region
          %s361 = sand.u32 %s66, 1
          %s362 = scalar_lea.sflag [#allocation3], %s361
          %s363 = sand.u32 %s66, 1
          %s364 = smul.addr %s363, 256
          %s365 = scalar_lea.vmem [#allocation2], %s364
          %s366 = smul.u32 8, %s30
          %368 = vsyncadd %s362, 0
          %s369 = smul.addr %s366, 8
          %s370 = scalar_lea.hbm %s1, %s369
          %s371 = sshll.u32 %s370, 4
          %s372 = int_to_ptr.hbm [resolvable:$true] %s371
          %s373 = sshll.u32 %s365, 4
          %s374 = int_to_ptr.vmem [resolvable:$true] %s373
          %379 = dma.hbm_to_vmem [thread:$0]  %s372, 4096, %s374, %s362, 2048, 1024, 64
        $region48: #{tpu_custom_call.1} parent=39 // pred_fallthru
          _
        // Predicated region
        $region49: #{tpu_custom_call.1} parent=39 // pred_check
          %p380 = pneg %p102
        $region50: #{tpu_custom_call.1} parent=39 // pred_check_branch
          %382 = sbr.rel (%p380) target = $region52
        $region51: #{tpu_custom_call.1} parent=39 // pred_region
          %s383 = sand.u32 %s92, 1
          %s384 = scalar_lea.sflag [#allocation6], %s383
          %s385 = sand.u32 %s92, 1
          %s386 = smul.addr %s385, 256
          %s387 = scalar_lea.vmem [#allocation5], %s386
          %s388 = smul.u32 8, %s30
          %390 = vsyncadd %s384, 0
          %s391 = smul.addr %s388, 8
          %s392 = scalar_lea.hbm %s2, %s391
          %s393 = sshll.u32 %s392, 4
          %s394 = int_to_ptr.hbm [resolvable:$true] %s393
          %s395 = sshll.u32 %s387, 4
          %s396 = int_to_ptr.vmem [resolvable:$true] %s395
          %401 = dma.hbm_to_vmem [thread:$0]  %s394, 4096, %s396, %s384, 2048, 1024, 64
        $region52: #{tpu_custom_call.1} parent=39 // pred_fallthru
          _
        // Predicated region
        $region53: #{tpu_custom_call.1} parent=39 // pred_check
          %p402 = pneg %p149
        $region54: #{tpu_custom_call.1} parent=39 // pred_check_branch
          %404 = sbr.rel (%p402) target = $region56
        $region55: #{tpu_custom_call.1} parent=39 // pred_region
          %p405 = scmp.lt.s32.totalorder %s30, 1
          %s406 = scalar_select %p405, %s30, 1
          %s407 = smul.addr %s406, 8
          %s408 = smul.addr %s407, 8
          %s409 = scalar_lea.vmem %s4, %s408
        $region56: #{tpu_custom_call.1} parent=39 // pred_fallthru
          _
      $region40: #{tpu_custom_call.1} parent=5 // pred_fallthru
        _
      %p410 = scmp.le.s32.totalorder 1, %s30
      %p411 = scmp.lt.s32.totalorder %s30, 3
      %p412 = pnand %p410, %p411
      %p413 = pneg %p412
      // Predicated region
      $region57: #{tpu_custom_call.1} parent=5 // pred_check
        _
      $region58: #{tpu_custom_call.1} parent=5 // pred_check_branch
        %415 = sbr.rel (%p412) target = $region60
      $region59: #{tpu_custom_call.1} parent=5 // pred_region
        %s416 = ssub.s32 %s30, 1
        %s417 = sand.u32 %s69, 1
        %s418 = scalar_lea.sflag [#allocation3], %s417
        %s419 = sand.u32 %s69, 1
        %s420 = smul.addr %s419, 256
        %s421 = scalar_lea.vmem [#allocation2], %s420
        // Predicated region
        $region61: #{tpu_custom_call.1} parent=59 // pred_check
          %p422 = pneg %p82
        $region62: #{tpu_custom_call.1} parent=59 // pred_check_branch
          %424 = sbr.rel (%p422) target = $region64
        $region63: #{tpu_custom_call.1} parent=59 // pred_region
          %426 = dma.done %s418, 4096
        $region64: #{tpu_custom_call.1} parent=59 // pred_fallthru
          _
        %s427 = sand.u32 %s95, 1
        %s428 = scalar_lea.sflag [#allocation6], %s427
        %s429 = sand.u32 %s95, 1
        %s430 = smul.addr %s429, 256
        %s431 = scalar_lea.vmem [#allocation5], %s430
        // Predicated region
        $region65: #{tpu_custom_call.1} parent=59 // pred_check
          %p432 = pneg %p108
        $region66: #{tpu_custom_call.1} parent=59 // pred_check_branch
          %434 = sbr.rel (%p432) target = $region68
        $region67: #{tpu_custom_call.1} parent=59 // pred_region
          %436 = dma.done %s428, 4096
        $region68: #{tpu_custom_call.1} parent=59 // pred_fallthru
          _
        %s437 = smul.u32 8, %s35
        %p438 = scmp.lt.s32.totalorder %s437, 15
        %s439 = scalar_select %p438, %s437, 15
        %s440 = smul.addr %s439, 4
        %s441 = scalar_lea.vmem %s0, %s440
        %p442 = pneg %p56
        %p443 = pneg %p53
        %s444 = sand.u32 %s69, 1
        %s445 = scalar_lea.sflag [#allocation3], %s444
        %s446 = sand.u32 %s69, 1
        %s447 = smul.addr %s446, 256
        %s448 = scalar_lea.vmem [#allocation2], %s447
        %p449 = pneg %p82
        %p450 = pneg %p79
        %s451 = sand.u32 %s95, 1
        %s452 = scalar_lea.sflag [#allocation6], %s451
        %s453 = sand.u32 %s95, 1
        %s454 = smul.addr %s453, 256
        %s455 = scalar_lea.vmem [#allocation5], %s454
        %p456 = pneg %p108
        %p457 = pneg %p105
        %p458 = pneg %p129
        %p459 = pneg %p126
        %p460 = scmp.lt.s32.totalorder %s35, 1
        %s461 = scalar_select %p460, %s35, 1
        %s462 = smul.addr %s461, 8
        %s463 = smul.addr %s462, 8
        %s464 = scalar_lea.vmem %s4, %s463
        %p465 = pneg %p155
        %p466 = pneg %p152
        %p467 = pneg %p176
        %p468 = pneg %p173
        %p469 = pneg %p197
        %p470 = pneg %p194
        %p471 = pneg %p218
        %p472 = pneg %p215
        %p473 = pneg %p239
        %p474 = pneg %p236
        %p475 = pneg %p260
        %p476 = pneg %p257
        %p477 = pneg %p286
        %p478 = pneg %p283
        %s479 = sand.u32 %s273, 1
        %s480 = scalar_lea.sflag [#allocation4], %s479
        %s481 = sand.u32 %s273, 1
        %s482 = smul.addr %s481, 64
        %s483 = scalar_lea.vmem [#allocation7], %s482
        %p484 = pneg %p312
        %p485 = pneg %p309
        %s486 = sand.u32 %s299, 1
        %s487 = scalar_lea.sflag [#allocation9], %s486
        %s488 = sand.u32 %s299, 1
        %s489 = smul.addr %s488, 64
        %s490 = scalar_lea.vmem [#allocation8], %s489
        %s491 = smul.u32 8, %s35
        %p492 = scmp.lt.s32.totalorder %s491, 15
        %s493 = scalar_select %p492, %s491, 15
        %s494 = smul.addr %s493, 4
        %s495 = scalar_lea.vmem %s0, %s494
        %s496 = smul.u32 8, %s35
        %s497 = smul.u32 8, %s35
        %s498 = smul.u32 8, %s35
        %p499 = scmp.lt.s32.totalorder %s35, 1
        %s500 = scalar_select %p499, %s35, 1
        %s501 = smul.addr %s500, 8
        %s502 = smul.addr %s501, 8
        %s503 = scalar_lea.vmem %s4, %s502
        %s504 = smul.u32 8, %s35
        %s505 = smul.u32 8, %s35
        %v506 = vld [vmem:[%s495] sm:$0x77]
        %v507 = vld [vmem:[%s495 + $0x8] sm:$0x77]
        %v508 = vld [vmem:[%s495 + $0x10] sm:$0x77]
        %v509 = vld [vmem:[%s495 + $0x18] sm:$0x77]
        %v514 = vperm.slane %v506, 0
        %v515 = vperm.slane %v506, 4
        %v516 = vperm.slane %v507, 0
        %v517 = vperm.slane %v507, 4
        %v518 = vperm.slane %v508, 0
        %v519 = vperm.slane %v508, 4
        %v520 = vperm.slane %v509, 0
        %v521 = vperm.slane %v509, 4
        %v530 = vperm.slane %v514, 0
        %v531 = vperm.slane %v515, 0
        %v532 = vperm.slane %v516, 0
        %v533 = vperm.slane %v517, 0
        %v534 = vperm.slane %v518, 0
        %v535 = vperm.slane %v519, 0
        %v536 = vperm.slane %v520, 0
        %v537 = vperm.slane %v521, 0
        %v538 = vperm.slane %v506, 1
        %v539 = vperm.slane %v506, 5
        %v540 = vperm.slane %v507, 1
        %v541 = vperm.slane %v507, 5
        %v542 = vperm.slane %v508, 1
        %v543 = vperm.slane %v508, 5
        %v544 = vperm.slane %v509, 1
        %v545 = vperm.slane %v509, 5
        %v554 = vperm.slane %v538, 1
        %v555 = vperm.slane %v539, 1
        %v556 = vperm.slane %v540, 1
        %v557 = vperm.slane %v541, 1
        %v558 = vperm.slane %v542, 1
        %v559 = vperm.slane %v543, 1
        %v560 = vperm.slane %v544, 1
        %v561 = vperm.slane %v545, 1
        %v562 = vperm.slane %v506, 2
        %v563 = vperm.slane %v506, 6
        %v564 = vperm.slane %v507, 2
        %v565 = vperm.slane %v507, 6
        %v566 = vperm.slane %v508, 2
        %v567 = vperm.slane %v508, 6
        %v568 = vperm.slane %v509, 2
        %v569 = vperm.slane %v509, 6
        %v578 = vperm.slane %v562, 2
        %v579 = vperm.slane %v563, 2
        %v580 = vperm.slane %v564, 2
        %v581 = vperm.slane %v565, 2
        %v582 = vperm.slane %v566, 2
        %v583 = vperm.slane %v567, 2
        %v584 = vperm.slane %v568, 2
        %v585 = vperm.slane %v569, 2
        %v586 = vld [vmem:[%s421] sm:$0xff]
        %v587 = vld [vmem:[%s421 + $0x8] sm:$0xff]
        %v588 = vld [vmem:[%s421 + $0x10] sm:$0xff]
        %v589 = vld [vmem:[%s421 + $0x18] sm:$0xff]
        %v590 = vld [vmem:[%s421 + $0x20] sm:$0xff]
        %v591 = vld [vmem:[%s421 + $0x28] sm:$0xff]
        %v592 = vld [vmem:[%s421 + $0x30] sm:$0xff]
        %v593 = vld [vmem:[%s421 + $0x38] sm:$0xff]
        %v594 = vld [vmem:[%s421 + $0x40] sm:$0xff]
        %v595 = vld [vmem:[%s421 + $0x48] sm:$0xff]
        %v596 = vld [vmem:[%s421 + $0x50] sm:$0xff]
        %v597 = vld [vmem:[%s421 + $0x58] sm:$0xff]
        %v598 = vld [vmem:[%s421 + $0x60] sm:$0xff]
        %v599 = vld [vmem:[%s421 + $0x68] sm:$0xff]
        %v600 = vld [vmem:[%s421 + $0x70] sm:$0xff]
        %v601 = vld [vmem:[%s421 + $0x78] sm:$0xff]
        %v602 = vld [vmem:[%s421 + $0x80] sm:$0xff]
        %v603 = vld [vmem:[%s421 + $0x88] sm:$0xff]
        %v604 = vld [vmem:[%s421 + $0x90] sm:$0xff]
        %v605 = vld [vmem:[%s421 + $0x98] sm:$0xff]
        %v606 = vld [vmem:[%s421 + $0xa0] sm:$0xff]
        %v607 = vld [vmem:[%s421 + $0xa8] sm:$0xff]
        %v608 = vld [vmem:[%s421 + $0xb0] sm:$0xff]
        %v609 = vld [vmem:[%s421 + $0xb8] sm:$0xff]
        %v610 = vld [vmem:[%s421 + $0xc0] sm:$0xff]
        %v611 = vld [vmem:[%s421 + $0xc8] sm:$0xff]
        %v612 = vld [vmem:[%s421 + $0xd0] sm:$0xff]
        %v613 = vld [vmem:[%s421 + $0xd8] sm:$0xff]
        %v614 = vld [vmem:[%s421 + $0xe0] sm:$0xff]
        %v615 = vld [vmem:[%s421 + $0xe8] sm:$0xff]
        %v616 = vld [vmem:[%s421 + $0xf0] sm:$0xff]
        %v617 = vld [vmem:[%s421 + $0xf8] sm:$0xff]
        %v618 = vld [vmem:[%s431] sm:$0xff]
        %v619 = vld [vmem:[%s431 + $0x8] sm:$0xff]
        %v620 = vld [vmem:[%s431 + $0x10] sm:$0xff]
        %v621 = vld [vmem:[%s431 + $0x18] sm:$0xff]
        %v622 = vld [vmem:[%s431 + $0x20] sm:$0xff]
        %v623 = vld [vmem:[%s431 + $0x28] sm:$0xff]
        %v624 = vld [vmem:[%s431 + $0x30] sm:$0xff]
        %v625 = vld [vmem:[%s431 + $0x38] sm:$0xff]
        %v626 = vld [vmem:[%s431 + $0x40] sm:$0xff]
        %v627 = vld [vmem:[%s431 + $0x48] sm:$0xff]
        %v628 = vld [vmem:[%s431 + $0x50] sm:$0xff]
        %v629 = vld [vmem:[%s431 + $0x58] sm:$0xff]
        %v630 = vld [vmem:[%s431 + $0x60] sm:$0xff]
        %v631 = vld [vmem:[%s431 + $0x68] sm:$0xff]
        %v632 = vld [vmem:[%s431 + $0x70] sm:$0xff]
        %v633 = vld [vmem:[%s431 + $0x78] sm:$0xff]
        %v634 = vld [vmem:[%s431 + $0x80] sm:$0xff]
        %v635 = vld [vmem:[%s431 + $0x88] sm:$0xff]
        %v636 = vld [vmem:[%s431 + $0x90] sm:$0xff]
        %v637 = vld [vmem:[%s431 + $0x98] sm:$0xff]
        %v638 = vld [vmem:[%s431 + $0xa0] sm:$0xff]
        %v639 = vld [vmem:[%s431 + $0xa8] sm:$0xff]
        %v640 = vld [vmem:[%s431 + $0xb0] sm:$0xff]
        %v641 = vld [vmem:[%s431 + $0xb8] sm:$0xff]
        %v642 = vld [vmem:[%s431 + $0xc0] sm:$0xff]
        %v643 = vld [vmem:[%s431 + $0xc8] sm:$0xff]
        %v644 = vld [vmem:[%s431 + $0xd0] sm:$0xff]
        %v645 = vld [vmem:[%s431 + $0xd8] sm:$0xff]
        %v646 = vld [vmem:[%s431 + $0xe0] sm:$0xff]
        %v647 = vld [vmem:[%s431 + $0xe8] sm:$0xff]
        %v648 = vld [vmem:[%s431 + $0xf0] sm:$0xff]
        %v649 = vld [vmem:[%s431 + $0xf8] sm:$0xff]
        %v650 = vsub.f32 0.0, %v594
        %v651 = vsub.f32 0.0, %v595
        %v652 = vsub.f32 0.0, %v596
        %v653 = vsub.f32 0.0, %v597
        %v654 = vsub.f32 0.0, %v598
        %v655 = vsub.f32 0.0, %v599
        %v656 = vsub.f32 0.0, %v600
        %v657 = vsub.f32 0.0, %v601
        %v658 = vsub.f32 0.0, %v602
        %v659 = vsub.f32 0.0, %v603
        %v660 = vsub.f32 0.0, %v604
        %v661 = vsub.f32 0.0, %v605
        %v662 = vsub.f32 0.0, %v606
        %v663 = vsub.f32 0.0, %v607
        %v664 = vsub.f32 0.0, %v608
        %v665 = vsub.f32 0.0, %v609
        %v666 = vsub.f32 0.0, %v610
        %v667 = vsub.f32 0.0, %v611
        %v668 = vsub.f32 0.0, %v612
        %v669 = vsub.f32 0.0, %v613
        %v670 = vsub.f32 0.0, %v614
        %v671 = vsub.f32 0.0, %v615
        %v672 = vsub.f32 0.0, %v616
        %v673 = vsub.f32 0.0, %v617
        %v674 = vmul.f32 %v658, %v578
        %v675 = vmul.f32 %v659, %v579
        %v676 = vmul.f32 %v660, %v580
        %v677 = vmul.f32 %v661, %v581
        %v678 = vmul.f32 %v662, %v582
        %v679 = vmul.f32 %v663, %v583
        %v680 = vmul.f32 %v664, %v584
        %v681 = vmul.f32 %v665, %v585
        %v682 = vmul.f32 %v666, %v554
        %v683 = vmul.f32 %v667, %v555
        %v684 = vmul.f32 %v668, %v556
        %v685 = vmul.f32 %v669, %v557
        %v686 = vmul.f32 %v670, %v558
        %v687 = vmul.f32 %v671, %v559
        %v688 = vmul.f32 %v672, %v560
        %v689 = vmul.f32 %v673, %v561
        %v690 = vsub.f32 %v674, %v682
        %v691 = vsub.f32 %v675, %v683
        %v692 = vsub.f32 %v676, %v684
        %v693 = vsub.f32 %v677, %v685
        %v694 = vsub.f32 %v678, %v686
        %v695 = vsub.f32 %v679, %v687
        %v696 = vsub.f32 %v680, %v688
        %v697 = vsub.f32 %v681, %v689
        %v698 = vmul.f32 %v666, %v530
        %v699 = vmul.f32 %v667, %v531
        %v700 = vmul.f32 %v668, %v532
        %v701 = vmul.f32 %v669, %v533
        %v702 = vmul.f32 %v670, %v534
        %v703 = vmul.f32 %v671, %v535
        %v704 = vmul.f32 %v672, %v536
        %v705 = vmul.f32 %v673, %v537
        %v706 = vmul.f32 %v650, %v578
        %v707 = vmul.f32 %v651, %v579
        %v708 = vmul.f32 %v652, %v580
        %v709 = vmul.f32 %v653, %v581
        %v710 = vmul.f32 %v654, %v582
        %v711 = vmul.f32 %v655, %v583
        %v712 = vmul.f32 %v656, %v584
        %v713 = vmul.f32 %v657, %v585
        %v714 = vsub.f32 %v698, %v706
        %v715 = vsub.f32 %v699, %v707
        %v716 = vsub.f32 %v700, %v708
        %v717 = vsub.f32 %v701, %v709
        %v718 = vsub.f32 %v702, %v710
        %v719 = vsub.f32 %v703, %v711
        %v720 = vsub.f32 %v704, %v712
        %v721 = vsub.f32 %v705, %v713
        %v722 = vmul.f32 %v650, %v554
        %v723 = vmul.f32 %v651, %v555
        %v724 = vmul.f32 %v652, %v556
        %v725 = vmul.f32 %v653, %v557
        %v726 = vmul.f32 %v654, %v558
        %v727 = vmul.f32 %v655, %v559
        %v728 = vmul.f32 %v656, %v560
        %v729 = vmul.f32 %v657, %v561
        %v730 = vmul.f32 %v658, %v530
        %v731 = vmul.f32 %v659, %v531
        %v732 = vmul.f32 %v660, %v532
        %v733 = vmul.f32 %v661, %v533
        %v734 = vmul.f32 %v662, %v534
        %v735 = vmul.f32 %v663, %v535
        %v736 = vmul.f32 %v664, %v536
        %v737 = vmul.f32 %v665, %v537
        %v738 = vsub.f32 %v722, %v730
        %v739 = vsub.f32 %v723, %v731
        %v740 = vsub.f32 %v724, %v732
        %v741 = vsub.f32 %v725, %v733
        %v742 = vsub.f32 %v726, %v734
        %v743 = vsub.f32 %v727, %v735
        %v744 = vsub.f32 %v728, %v736
        %v745 = vsub.f32 %v729, %v737
        %v746 = vmul.f32 %v658, %v738
        %v747 = vmul.f32 %v659, %v739
        %v748 = vmul.f32 %v660, %v740
        %v749 = vmul.f32 %v661, %v741
        %v750 = vmul.f32 %v662, %v742
        %v751 = vmul.f32 %v663, %v743
        %v752 = vmul.f32 %v664, %v744
        %v753 = vmul.f32 %v665, %v745
        %v754 = vmul.f32 %v666, %v714
        %v755 = vmul.f32 %v667, %v715
        %v756 = vmul.f32 %v668, %v716
        %v757 = vmul.f32 %v669, %v717
        %v758 = vmul.f32 %v670, %v718
        %v759 = vmul.f32 %v671, %v719
        %v760 = vmul.f32 %v672, %v720
        %v761 = vmul.f32 %v673, %v721
        %v762 = vsub.f32 %v746, %v754
        %v763 = vsub.f32 %v747, %v755
        %v764 = vsub.f32 %v748, %v756
        %v765 = vsub.f32 %v749, %v757
        %v766 = vsub.f32 %v750, %v758
        %v767 = vsub.f32 %v751, %v759
        %v768 = vsub.f32 %v752, %v760
        %v769 = vsub.f32 %v753, %v761
        %v770 = vmul.f32 %v666, %v690
        %v771 = vmul.f32 %v667, %v691
        %v772 = vmul.f32 %v668, %v692
        %v773 = vmul.f32 %v669, %v693
        %v774 = vmul.f32 %v670, %v694
        %v775 = vmul.f32 %v671, %v695
        %v776 = vmul.f32 %v672, %v696
        %v777 = vmul.f32 %v673, %v697
        %v778 = vmul.f32 %v650, %v738
        %v779 = vmul.f32 %v651, %v739
        %v780 = vmul.f32 %v652, %v740
        %v781 = vmul.f32 %v653, %v741
        %v782 = vmul.f32 %v654, %v742
        %v783 = vmul.f32 %v655, %v743
        %v784 = vmul.f32 %v656, %v744
        %v785 = vmul.f32 %v657, %v745
        %v786 = vsub.f32 %v770, %v778
        %v787 = vsub.f32 %v771, %v779
        %v788 = vsub.f32 %v772, %v780
        %v789 = vsub.f32 %v773, %v781
        %v790 = vsub.f32 %v774, %v782
        %v791 = vsub.f32 %v775, %v783
        %v792 = vsub.f32 %v776, %v784
        %v793 = vsub.f32 %v777, %v785
        %v794 = vmul.f32 %v650, %v714
        %v795 = vmul.f32 %v651, %v715
        %v796 = vmul.f32 %v652, %v716
        %v797 = vmul.f32 %v653, %v717
        %v798 = vmul.f32 %v654, %v718
        %v799 = vmul.f32 %v655, %v719
        %v800 = vmul.f32 %v656, %v720
        %v801 = vmul.f32 %v657, %v721
        %v802 = vmul.f32 %v658, %v690
        %v803 = vmul.f32 %v659, %v691
        %v804 = vmul.f32 %v660, %v692
        %v805 = vmul.f32 %v661, %v693
        %v806 = vmul.f32 %v662, %v694
        %v807 = vmul.f32 %v663, %v695
        %v808 = vmul.f32 %v664, %v696
        %v809 = vmul.f32 %v665, %v697
        %v810 = vsub.f32 %v794, %v802
        %v811 = vsub.f32 %v795, %v803
        %v812 = vsub.f32 %v796, %v804
        %v813 = vsub.f32 %v797, %v805
        %v814 = vsub.f32 %v798, %v806
        %v815 = vsub.f32 %v799, %v807
        %v816 = vsub.f32 %v800, %v808
        %v817 = vsub.f32 %v801, %v809
        %v818 = vmul.f32 %v586, %v690
        %v819 = vmul.f32 %v587, %v691
        %v820 = vmul.f32 %v588, %v692
        %v821 = vmul.f32 %v589, %v693
        %v822 = vmul.f32 %v590, %v694
        %v823 = vmul.f32 %v591, %v695
        %v824 = vmul.f32 %v592, %v696
        %v825 = vmul.f32 %v593, %v697
        %v826 = vadd.f32 %v818, %v762
        %v827 = vadd.f32 %v819, %v763
        %v828 = vadd.f32 %v820, %v764
        %v829 = vadd.f32 %v821, %v765
        %v830 = vadd.f32 %v822, %v766
        %v831 = vadd.f32 %v823, %v767
        %v832 = vadd.f32 %v824, %v768
        %v833 = vadd.f32 %v825, %v769
        %v834 = vmul.f32 %v826, 2.0
        %v835 = vmul.f32 %v827, 2.0
        %v836 = vmul.f32 %v828, 2.0
        %v837 = vmul.f32 %v829, 2.0
        %v838 = vmul.f32 %v830, 2.0
        %v839 = vmul.f32 %v831, 2.0
        %v840 = vmul.f32 %v832, 2.0
        %v841 = vmul.f32 %v833, 2.0
        %v842 = vadd.f32 %v530, %v834
        %v843 = vadd.f32 %v531, %v835
        %v844 = vadd.f32 %v532, %v836
        %v845 = vadd.f32 %v533, %v837
        %v846 = vadd.f32 %v534, %v838
        %v847 = vadd.f32 %v535, %v839
        %v848 = vadd.f32 %v536, %v840
        %v849 = vadd.f32 %v537, %v841
        %v850 = vmul.f32 %v586, %v714
        %v851 = vmul.f32 %v587, %v715
        %v852 = vmul.f32 %v588, %v716
        %v853 = vmul.f32 %v589, %v717
        %v854 = vmul.f32 %v590, %v718
        %v855 = vmul.f32 %v591, %v719
        %v856 = vmul.f32 %v592, %v720
        %v857 = vmul.f32 %v593, %v721
        %v858 = vadd.f32 %v850, %v786
        %v859 = vadd.f32 %v851, %v787
        %v860 = vadd.f32 %v852, %v788
        %v861 = vadd.f32 %v853, %v789
        %v862 = vadd.f32 %v854, %v790
        %v863 = vadd.f32 %v855, %v791
        %v864 = vadd.f32 %v856, %v792
        %v865 = vadd.f32 %v857, %v793
        %v866 = vmul.f32 %v858, 2.0
        %v867 = vmul.f32 %v859, 2.0
        %v868 = vmul.f32 %v860, 2.0
        %v869 = vmul.f32 %v861, 2.0
        %v870 = vmul.f32 %v862, 2.0
        %v871 = vmul.f32 %v863, 2.0
        %v872 = vmul.f32 %v864, 2.0
        %v873 = vmul.f32 %v865, 2.0
        %v874 = vadd.f32 %v554, %v866
        %v875 = vadd.f32 %v555, %v867
        %v876 = vadd.f32 %v556, %v868
        %v877 = vadd.f32 %v557, %v869
        %v878 = vadd.f32 %v558, %v870
        %v879 = vadd.f32 %v559, %v871
        %v880 = vadd.f32 %v560, %v872
        %v881 = vadd.f32 %v561, %v873
        %v882 = vmul.f32 %v586, %v738
        %v883 = vmul.f32 %v587, %v739
        %v884 = vmul.f32 %v588, %v740
        %v885 = vmul.f32 %v589, %v741
        %v886 = vmul.f32 %v590, %v742
        %v887 = vmul.f32 %v591, %v743
        %v888 = vmul.f32 %v592, %v744
        %v889 = vmul.f32 %v593, %v745
        %v890 = vadd.f32 %v882, %v810
        %v891 = vadd.f32 %v883, %v811
        %v892 = vadd.f32 %v884, %v812
        %v893 = vadd.f32 %v885, %v813
        %v894 = vadd.f32 %v886, %v814
        %v895 = vadd.f32 %v887, %v815
        %v896 = vadd.f32 %v888, %v816
        %v897 = vadd.f32 %v889, %v817
        %v898 = vmul.f32 %v890, 2.0
        %v899 = vmul.f32 %v891, 2.0
        %v900 = vmul.f32 %v892, 2.0
        %v901 = vmul.f32 %v893, 2.0
        %v902 = vmul.f32 %v894, 2.0
        %v903 = vmul.f32 %v895, 2.0
        %v904 = vmul.f32 %v896, 2.0
        %v905 = vmul.f32 %v897, 2.0
        %v906 = vadd.f32 %v578, %v898
        %v907 = vadd.f32 %v579, %v899
        %v908 = vadd.f32 %v580, %v900
        %v909 = vadd.f32 %v581, %v901
        %v910 = vadd.f32 %v582, %v902
        %v911 = vadd.f32 %v583, %v903
        %v912 = vadd.f32 %v584, %v904
        %v913 = vadd.f32 %v585, %v905
        %v914 = vmul.f32 %v618, %v594
        %v915 = vmul.f32 %v619, %v595
        %v916 = vmul.f32 %v620, %v596
        %v917 = vmul.f32 %v621, %v597
        %v918 = vmul.f32 %v622, %v598
        %v919 = vmul.f32 %v623, %v599
        %v920 = vmul.f32 %v624, %v600
        %v921 = vmul.f32 %v625, %v601
        %v922 = vmul.f32 %v626, %v586
        %v923 = vmul.f32 %v627, %v587
        %v924 = vmul.f32 %v628, %v588
        %v925 = vmul.f32 %v629, %v589
        %v926 = vmul.f32 %v630, %v590
        %v927 = vmul.f32 %v631, %v591
        %v928 = vmul.f32 %v632, %v592
        %v929 = vmul.f32 %v633, %v593
        %v930 = vsub.f32 %v914, %v922
        %v931 = vsub.f32 %v915, %v923
        %v932 = vsub.f32 %v916, %v924
        %v933 = vsub.f32 %v917, %v925
        %v934 = vsub.f32 %v918, %v926
        %v935 = vsub.f32 %v919, %v927
        %v936 = vsub.f32 %v920, %v928
        %v937 = vsub.f32 %v921, %v929
        %v938 = vmul.f32 %v634, %v610
        %v939 = vmul.f32 %v635, %v611
        %v940 = vmul.f32 %v636, %v612
        %v941 = vmul.f32 %v637, %v613
        %v942 = vmul.f32 %v638, %v614
        %v943 = vmul.f32 %v639, %v615
        %v944 = vmul.f32 %v640, %v616
        %v945 = vmul.f32 %v641, %v617
        %v946 = vsub.f32 %v930, %v938
        %v947 = vsub.f32 %v931, %v939
        %v948 = vsub.f32 %v932, %v940
        %v949 = vsub.f32 %v933, %v941
        %v950 = vsub.f32 %v934, %v942
        %v951 = vsub.f32 %v935, %v943
        %v952 = vsub.f32 %v936, %v944
        %v953 = vsub.f32 %v937, %v945
        %v954 = vmul.f32 %v642, %v602
        %v955 = vmul.f32 %v643, %v603
        %v956 = vmul.f32 %v644, %v604
        %v957 = vmul.f32 %v645, %v605
        %v958 = vmul.f32 %v646, %v606
        %v959 = vmul.f32 %v647, %v607
        %v960 = vmul.f32 %v648, %v608
        %v961 = vmul.f32 %v649, %v609
        %v962 = vadd.f32 %v946, %v954
        %v963 = vadd.f32 %v947, %v955
        %v964 = vadd.f32 %v948, %v956
        %v965 = vadd.f32 %v949, %v957
        %v966 = vadd.f32 %v950, %v958
        %v967 = vadd.f32 %v951, %v959
        %v968 = vadd.f32 %v952, %v960
        %v969 = vadd.f32 %v953, %v961
        %v970 = vmul.f32 %v962, 2.0
        %v971 = vmul.f32 %v963, 2.0
        %v972 = vmul.f32 %v964, 2.0
        %v973 = vmul.f32 %v965, 2.0
        %v974 = vmul.f32 %v966, 2.0
        %v975 = vmul.f32 %v967, 2.0
        %v976 = vmul.f32 %v968, 2.0
        %v977 = vmul.f32 %v969, 2.0
        %v978 = vmul.f32 %v618, %v602
        %v979 = vmul.f32 %v619, %v603
        %v980 = vmul.f32 %v620, %v604
        %v981 = vmul.f32 %v621, %v605
        %v982 = vmul.f32 %v622, %v606
        %v983 = vmul.f32 %v623, %v607
        %v984 = vmul.f32 %v624, %v608
        %v985 = vmul.f32 %v625, %v609
        %v986 = vmul.f32 %v626, %v610
        %v987 = vmul.f32 %v627, %v611
        %v988 = vmul.f32 %v628, %v612
        %v989 = vmul.f32 %v629, %v613
        %v990 = vmul.f32 %v630, %v614
        %v991 = vmul.f32 %v631, %v615
        %v992 = vmul.f32 %v632, %v616
        %v993 = vmul.f32 %v633, %v617
        %v994 = vadd.f32 %v978, %v986
        %v995 = vadd.f32 %v979, %v987
        %v996 = vadd.f32 %v980, %v988
        %v997 = vadd.f32 %v981, %v989
        %v998 = vadd.f32 %v982, %v990
        %v999 = vadd.f32 %v983, %v991
        %v1000 = vadd.f32 %v984, %v992
        %v1001 = vadd.f32 %v985, %v993
        %v1002 = vmul.f32 %v634, %v586
        %v1003 = vmul.f32 %v635, %v587
        %v1004 = vmul.f32 %v636, %v588
        %v1005 = vmul.f32 %v637, %v589
        %v1006 = vmul.f32 %v638, %v590
        %v1007 = vmul.f32 %v639, %v591
        %v1008 = vmul.f32 %v640, %v592
        %v1009 = vmul.f32 %v641, %v593
        %v1010 = vsub.f32 %v994, %v1002
        %v1011 = vsub.f32 %v995, %v1003
        %v1012 = vsub.f32 %v996, %v1004
        %v1013 = vsub.f32 %v997, %v1005
        %v1014 = vsub.f32 %v998, %v1006
        %v1015 = vsub.f32 %v999, %v1007
        %v1016 = vsub.f32 %v1000, %v1008
        %v1017 = vsub.f32 %v1001, %v1009
        %v1018 = vmul.f32 %v642, %v594
        %v1019 = vmul.f32 %v643, %v595
        %v1020 = vmul.f32 %v644, %v596
        %v1021 = vmul.f32 %v645, %v597
        %v1022 = vmul.f32 %v646, %v598
        %v1023 = vmul.f32 %v647, %v599
        %v1024 = vmul.f32 %v648, %v600
        %v1025 = vmul.f32 %v649, %v601
        %v1026 = vsub.f32 %v1010, %v1018
        %v1027 = vsub.f32 %v1011, %v1019
        %v1028 = vsub.f32 %v1012, %v1020
        %v1029 = vsub.f32 %v1013, %v1021
        %v1030 = vsub.f32 %v1014, %v1022
        %v1031 = vsub.f32 %v1015, %v1023
        %v1032 = vsub.f32 %v1016, %v1024
        %v1033 = vsub.f32 %v1017, %v1025
        %v1034 = vmul.f32 %v1026, 2.0
        %v1035 = vmul.f32 %v1027, 2.0
        %v1036 = vmul.f32 %v1028, 2.0
        %v1037 = vmul.f32 %v1029, 2.0
        %v1038 = vmul.f32 %v1030, 2.0
        %v1039 = vmul.f32 %v1031, 2.0
        %v1040 = vmul.f32 %v1032, 2.0
        %v1041 = vmul.f32 %v1033, 2.0
        %v1042 = vmul.f32 %v618, %v610
        %v1043 = vmul.f32 %v619, %v611
        %v1044 = vmul.f32 %v620, %v612
        %v1045 = vmul.f32 %v621, %v613
        %v1046 = vmul.f32 %v622, %v614
        %v1047 = vmul.f32 %v623, %v615
        %v1048 = vmul.f32 %v624, %v616
        %v1049 = vmul.f32 %v625, %v617
        %v1050 = vmul.f32 %v626, %v602
        %v1051 = vmul.f32 %v627, %v603
        %v1052 = vmul.f32 %v628, %v604
        %v1053 = vmul.f32 %v629, %v605
        %v1054 = vmul.f32 %v630, %v606
        %v1055 = vmul.f32 %v631, %v607
        %v1056 = vmul.f32 %v632, %v608
        %v1057 = vmul.f32 %v633, %v609
        %v1058 = vsub.f32 %v1042, %v1050
        %v1059 = vsub.f32 %v1043, %v1051
        %v1060 = vsub.f32 %v1044, %v1052
        %v1061 = vsub.f32 %v1045, %v1053
        %v1062 = vsub.f32 %v1046, %v1054
        %v1063 = vsub.f32 %v1047, %v1055
        %v1064 = vsub.f32 %v1048, %v1056
        %v1065 = vsub.f32 %v1049, %v1057
        %v1066 = vmul.f32 %v634, %v594
        %v1067 = vmul.f32 %v635, %v595
        %v1068 = vmul.f32 %v636, %v596
        %v1069 = vmul.f32 %v637, %v597
        %v1070 = vmul.f32 %v638, %v598
        %v1071 = vmul.f32 %v639, %v599
        %v1072 = vmul.f32 %v640, %v600
        %v1073 = vmul.f32 %v641, %v601
        %v1074 = vadd.f32 %v1058, %v1066
        %v1075 = vadd.f32 %v1059, %v1067
        %v1076 = vadd.f32 %v1060, %v1068
        %v1077 = vadd.f32 %v1061, %v1069
        %v1078 = vadd.f32 %v1062, %v1070
        %v1079 = vadd.f32 %v1063, %v1071
        %v1080 = vadd.f32 %v1064, %v1072
        %v1081 = vadd.f32 %v1065, %v1073
        %v1082 = vmul.f32 %v642, %v586
        %v1083 = vmul.f32 %v643, %v587
        %v1084 = vmul.f32 %v644, %v588
        %v1085 = vmul.f32 %v645, %v589
        %v1086 = vmul.f32 %v646, %v590
        %v1087 = vmul.f32 %v647, %v591
        %v1088 = vmul.f32 %v648, %v592
        %v1089 = vmul.f32 %v649, %v593
        %v1090 = vsub.f32 %v1074, %v1082
        %v1091 = vsub.f32 %v1075, %v1083
        %v1092 = vsub.f32 %v1076, %v1084
        %v1093 = vsub.f32 %v1077, %v1085
        %v1094 = vsub.f32 %v1078, %v1086
        %v1095 = vsub.f32 %v1079, %v1087
        %v1096 = vsub.f32 %v1080, %v1088
        %v1097 = vsub.f32 %v1081, %v1089
        %v1098 = vmul.f32 %v1090, 2.0
        %v1099 = vmul.f32 %v1091, 2.0
        %v1100 = vmul.f32 %v1092, 2.0
        %v1101 = vmul.f32 %v1093, 2.0
        %v1102 = vmul.f32 %v1094, 2.0
        %v1103 = vmul.f32 %v1095, 2.0
        %v1104 = vmul.f32 %v1096, 2.0
        %v1105 = vmul.f32 %v1097, 2.0
        %v1106 = vld [vmem:[%s3] sm:$0xff]
        %v1107 = vld [vmem:[%s3 + $0x8] sm:$0xff]
        %v1108 = vld [vmem:[%s3 + $0x10] sm:$0xff]
        %v1109 = vadd.f32 %v842, %v970
        %v1110 = vadd.f32 %v843, %v971
        %v1111 = vadd.f32 %v844, %v972
        %v1112 = vadd.f32 %v845, %v973
        %v1113 = vadd.f32 %v846, %v974
        %v1114 = vadd.f32 %v847, %v975
        %v1115 = vadd.f32 %v848, %v976
        %v1116 = vadd.f32 %v849, %v977
        %1118 = vset.pattern.permute.xlu0 0
        %1119 = vperm.xlu0 %1118, %v1106
        %v1120 = vpop.permute.xlu0 %1119
        %v1122 = vmul.f32 %v1109, %v1120
        %v1123 = vmul.f32 %v1110, %v1120
        %v1124 = vmul.f32 %v1111, %v1120
        %v1125 = vmul.f32 %v1112, %v1120
        %v1126 = vmul.f32 %v1113, %v1120
        %v1127 = vmul.f32 %v1114, %v1120
        %v1128 = vmul.f32 %v1115, %v1120
        %v1129 = vmul.f32 %v1116, %v1120
        %v1130 = vadd.f32 %v874, %v1034
        %v1131 = vadd.f32 %v875, %v1035
        %v1132 = vadd.f32 %v876, %v1036
        %v1133 = vadd.f32 %v877, %v1037
        %v1134 = vadd.f32 %v878, %v1038
        %v1135 = vadd.f32 %v879, %v1039
        %v1136 = vadd.f32 %v880, %v1040
        %v1137 = vadd.f32 %v881, %v1041
        %1139 = vset.pattern.permute.xlu0 0
        %1140 = vperm.xlu0 %1139, %v1107
        %v1141 = vpop.permute.xlu0 %1140
        %v1143 = vmul.f32 %v1130, %v1141
        %v1144 = vmul.f32 %v1131, %v1141
        %v1145 = vmul.f32 %v1132, %v1141
        %v1146 = vmul.f32 %v1133, %v1141
        %v1147 = vmul.f32 %v1134, %v1141
        %v1148 = vmul.f32 %v1135, %v1141
        %v1149 = vmul.f32 %v1136, %v1141
        %v1150 = vmul.f32 %v1137, %v1141
        %v1151 = vadd.f32 %v906, %v1098
        %v1152 = vadd.f32 %v907, %v1099
        %v1153 = vadd.f32 %v908, %v1100
        %v1154 = vadd.f32 %v909, %v1101
        %v1155 = vadd.f32 %v910, %v1102
        %v1156 = vadd.f32 %v911, %v1103
        %v1157 = vadd.f32 %v912, %v1104
        %v1158 = vadd.f32 %v913, %v1105
        %1160 = vset.pattern.permute.xlu0 0
        %1161 = vperm.xlu0 %1160, %v1108
        %v1162 = vpop.permute.xlu0 %1161
        %v1164 = vmul.f32 %v1151, %v1162
        %v1165 = vmul.f32 %v1152, %v1162
        %v1166 = vmul.f32 %v1153, %v1162
        %v1167 = vmul.f32 %v1154, %v1162
        %v1168 = vmul.f32 %v1155, %v1162
        %v1169 = vmul.f32 %v1156, %v1162
        %v1170 = vmul.f32 %v1157, %v1162
        %v1171 = vmul.f32 %v1158, %v1162
        %v1172 = vmul.f32 %v1122, %v1122
        %v1173 = vmul.f32 %v1123, %v1123
        %v1174 = vmul.f32 %v1124, %v1124
        %v1175 = vmul.f32 %v1125, %v1125
        %v1176 = vmul.f32 %v1126, %v1126
        %v1177 = vmul.f32 %v1127, %v1127
        %v1178 = vmul.f32 %v1128, %v1128
        %v1179 = vmul.f32 %v1129, %v1129
        %v1180 = vmul.f32 %v1143, %v1143
        %v1181 = vmul.f32 %v1144, %v1144
        %v1182 = vmul.f32 %v1145, %v1145
        %v1183 = vmul.f32 %v1146, %v1146
        %v1184 = vmul.f32 %v1147, %v1147
        %v1185 = vmul.f32 %v1148, %v1148
        %v1186 = vmul.f32 %v1149, %v1149
        %v1187 = vmul.f32 %v1150, %v1150
        %v1188 = vadd.f32 %v1172, %v1180
        %v1189 = vadd.f32 %v1173, %v1181
        %v1190 = vadd.f32 %v1174, %v1182
        %v1191 = vadd.f32 %v1175, %v1183
        %v1192 = vadd.f32 %v1176, %v1184
        %v1193 = vadd.f32 %v1177, %v1185
        %v1194 = vadd.f32 %v1178, %v1186
        %v1195 = vadd.f32 %v1179, %v1187
        %v1196 = vmul.f32 %v1164, %v1164
        %v1197 = vmul.f32 %v1165, %v1165
        %v1198 = vmul.f32 %v1166, %v1166
        %v1199 = vmul.f32 %v1167, %v1167
        %v1200 = vmul.f32 %v1168, %v1168
        %v1201 = vmul.f32 %v1169, %v1169
        %v1202 = vmul.f32 %v1170, %v1170
        %v1203 = vmul.f32 %v1171, %v1171
        %v1204 = vadd.f32 %v1188, %v1196
        %v1205 = vadd.f32 %v1189, %v1197
        %v1206 = vadd.f32 %v1190, %v1198
        %v1207 = vadd.f32 %v1191, %v1199
        %v1208 = vadd.f32 %v1192, %v1200
        %v1209 = vadd.f32 %v1193, %v1201
        %v1210 = vadd.f32 %v1194, %v1202
        %v1211 = vadd.f32 %v1195, %v1203
        %v1212 = vld [vmem:[%s5] sm:$0xff]
        %v1213 = vld [vmem:[%s5 + $0x8] sm:$0xff]
        %v1214 = vld [vmem:[%s5 + $0x10] sm:$0xff]
        %v1215 = vld [vmem:[%s5 + $0x18] sm:$0xff]
        %v1216 = vld [vmem:[%s5 + $0x20] sm:$0xff]
        %v1217 = vld [vmem:[%s5 + $0x28] sm:$0xff]
        %v1218 = vld [vmem:[%s5 + $0x30] sm:$0xff]
        %v1219 = vld [vmem:[%s5 + $0x38] sm:$0xff]
        %v1220 = vld [vmem:[%s503] sm:$0xff]
        %v1221 = vld [vmem:[%s503 + $0x8] sm:$0xff]
        %v1222 = vld [vmem:[%s503 + $0x10] sm:$0xff]
        %v1223 = vld [vmem:[%s503 + $0x18] sm:$0xff]
        %v1224 = vld [vmem:[%s503 + $0x20] sm:$0xff]
        %v1225 = vld [vmem:[%s503 + $0x28] sm:$0xff]
        %v1226 = vld [vmem:[%s503 + $0x30] sm:$0xff]
        %v1227 = vld [vmem:[%s503 + $0x38] sm:$0xff]
        %1229 = vset.pattern.permute.xlu0 0
        %1230 = vperm.xlu0 %1229, %v1220
        %v1231 = vpop.permute.xlu0 %1230
        %1234 = vset.pattern.permute.xlu0 0
        %1235 = vperm.xlu0 %1234, %v1221
        %v1236 = vpop.permute.xlu0 %1235
        %1239 = vset.pattern.permute.xlu0 0
        %1240 = vperm.xlu0 %1239, %v1222
        %v1241 = vpop.permute.xlu0 %1240
        %1244 = vset.pattern.permute.xlu0 0
        %1245 = vperm.xlu0 %1244, %v1223
        %v1246 = vpop.permute.xlu0 %1245
        %1249 = vset.pattern.permute.xlu0 0
        %1250 = vperm.xlu0 %1249, %v1224
        %v1251 = vpop.permute.xlu0 %1250
        %1254 = vset.pattern.permute.xlu0 0
        %1255 = vperm.xlu0 %1254, %v1225
        %v1256 = vpop.permute.xlu0 %1255
        %1259 = vset.pattern.permute.xlu0 0
        %1260 = vperm.xlu0 %1259, %v1226
        %v1261 = vpop.permute.xlu0 %1260
        %1264 = vset.pattern.permute.xlu0 0
        %1265 = vperm.xlu0 %1264, %v1227
        %v1266 = vpop.permute.xlu0 %1265
        %vm1268 = vcmask 195584
        %v1270 = vsel %vm1268, %v1212, 0
        %v1273 = vsel %vm1268, %v1213, 0
        %v1276 = vsel %vm1268, %v1214, 0
        %v1279 = vsel %vm1268, %v1215, 0
        %v1282 = vsel %vm1268, %v1216, 0
        %v1285 = vsel %vm1268, %v1217, 0
        %v1288 = vsel %vm1268, %v1218, 0
        %v1291 = vsel %vm1268, %v1219, 0
        %1293 = vmatpush.msra.mxu0 0.0
        %1294 = vmatpush.msra.mxu0 0.0
        %1295 = vmatpush.msra.mxu0 0.0
        %1296 = vmatpush.msra.mxu0 0.0
        %1297 = vmatpush.msra.mxu0 0.0
        %1298 = vmatpush.msra.mxu0 0.0
        %1299 = vmatpush.msra.mxu0 0.0
        %1300 = vmatpush.msra.mxu0 0.0
        %1301 = vmatpush.msra.mxu0 0.0
        %1302 = vmatpush.msra.mxu0 0.0
        %1303 = vmatpush.msra.mxu0 0.0
        %1304 = vmatpush.msra.mxu0 0.0
        %1305 = vmatpush.msra.mxu0 0.0
        %1306 = vmatpush.msra.mxu0 %v1164
        %1307 = vmatpush.msra.mxu0 %v1143
        %1308 = vmatpush.msra.mxu0 %v1122
        %1309 = vmatmul.f32.gmra.mxu0 %v1270
        %v1310 = vpop.f32.mrf.mxu0
        %v1311 = vadd.f32 %v1231, %v1310
        %1312 = vmatmul.f32.gmra.mxu0 %v1273
        %v1313 = vpop.f32.mrf.mxu0
        %v1314 = vadd.f32 %v1236, %v1313
        %1315 = vmatmul.f32.gmra.mxu0 %v1276
        %v1316 = vpop.f32.mrf.mxu0
        %v1317 = vadd.f32 %v1241, %v1316
        %1318 = vmatmul.f32.gmra.mxu0 %v1279
        %v1319 = vpop.f32.mrf.mxu0
        %v1320 = vadd.f32 %v1246, %v1319
        %1321 = vmatmul.f32.gmra.mxu0 %v1282
        %v1322 = vpop.f32.mrf.mxu0
        %v1323 = vadd.f32 %v1251, %v1322
        %1324 = vmatmul.f32.gmra.mxu0 %v1285
        %v1325 = vpop.f32.mrf.mxu0
        %v1326 = vadd.f32 %v1256, %v1325
        %1327 = vmatmul.f32.gmra.mxu0 %v1288
        %v1328 = vpop.f32.mrf.mxu0
        %v1329 = vadd.f32 %v1261, %v1328
        %1330 = vmatmul.f32.gmra.mxu0 %v1291
        %v1331 = vpop.f32.mrf.mxu0
        %v1332 = vadd.f32 %v1266, %v1331
        %1333 = vdwg.mxu0
        %1334 = vmatpush.msra.mxu0 0.0
        %1335 = vmatpush.msra.mxu0 0.0
        %1336 = vmatpush.msra.mxu0 0.0
        %1337 = vmatpush.msra.mxu0 0.0
        %1338 = vmatpush.msra.mxu0 0.0
        %1339 = vmatpush.msra.mxu0 0.0
        %1340 = vmatpush.msra.mxu0 0.0
        %1341 = vmatpush.msra.mxu0 0.0
        %1342 = vmatpush.msra.mxu0 0.0
        %1343 = vmatpush.msra.mxu0 0.0
        %1344 = vmatpush.msra.mxu0 0.0
        %1345 = vmatpush.msra.mxu0 0.0
        %1346 = vmatpush.msra.mxu0 0.0
        %1347 = vmatpush.msra.mxu0 %v1165
        %1348 = vmatpush.msra.mxu0 %v1144
        %1349 = vmatpush.msra.mxu0 %v1123
        %1350 = vmatmul.f32.gmra.mxu0 %v1270
        %v1351 = vpop.f32.mrf.mxu0
        %v1352 = vadd.f32 %v1231, %v1351
        %1353 = vmatmul.f32.gmra.mxu0 %v1273
        %v1354 = vpop.f32.mrf.mxu0
        %v1355 = vadd.f32 %v1236, %v1354
        %1356 = vmatmul.f32.gmra.mxu0 %v1276
        %v1357 = vpop.f32.mrf.mxu0
        %v1358 = vadd.f32 %v1241, %v1357
        %1359 = vmatmul.f32.gmra.mxu0 %v1279
        %v1360 = vpop.f32.mrf.mxu0
        %v1361 = vadd.f32 %v1246, %v1360
        %1362 = vmatmul.f32.gmra.mxu0 %v1282
        %v1363 = vpop.f32.mrf.mxu0
        %v1364 = vadd.f32 %v1251, %v1363
        %1365 = vmatmul.f32.gmra.mxu0 %v1285
        %v1366 = vpop.f32.mrf.mxu0
        %v1367 = vadd.f32 %v1256, %v1366
        %1368 = vmatmul.f32.gmra.mxu0 %v1288
        %v1369 = vpop.f32.mrf.mxu0
        %v1370 = vadd.f32 %v1261, %v1369
        %1371 = vmatmul.f32.gmra.mxu0 %v1291
        %v1372 = vpop.f32.mrf.mxu0
        %v1373 = vadd.f32 %v1266, %v1372
        %1374 = vdwg.mxu0
        %1375 = vmatpush.msra.mxu0 0.0
        %1376 = vmatpush.msra.mxu0 0.0
        %1377 = vmatpush.msra.mxu0 0.0
        %1378 = vmatpush.msra.mxu0 0.0
        %1379 = vmatpush.msra.mxu0 0.0
        %1380 = vmatpush.msra.mxu0 0.0
        %1381 = vmatpush.msra.mxu0 0.0
        %1382 = vmatpush.msra.mxu0 0.0
        %1383 = vmatpush.msra.mxu0 0.0
        %1384 = vmatpush.msra.mxu0 0.0
        %1385 = vmatpush.msra.mxu0 0.0
        %1386 = vmatpush.msra.mxu0 0.0
        %1387 = vmatpush.msra.mxu0 0.0
        %1388 = vmatpush.msra.mxu0 %v1166
        %1389 = vmatpush.msra.mxu0 %v1145
        %1390 = vmatpush.msra.mxu0 %v1124
        %1391 = vmatmul.f32.gmra.mxu0 %v1270
        %v1392 = vpop.f32.mrf.mxu0
        %v1393 = vadd.f32 %v1231, %v1392
        %1394 = vmatmul.f32.gmra.mxu0 %v1273
        %v1395 = vpop.f32.mrf.mxu0
        %v1396 = vadd.f32 %v1236, %v1395
        %1397 = vmatmul.f32.gmra.mxu0 %v1276
        %v1398 = vpop.f32.mrf.mxu0
        %v1399 = vadd.f32 %v1241, %v1398
        %1400 = vmatmul.f32.gmra.mxu0 %v1279
        %v1401 = vpop.f32.mrf.mxu0
        %v1402 = vadd.f32 %v1246, %v1401
        %1403 = vmatmul.f32.gmra.mxu0 %v1282
        %v1404 = vpop.f32.mrf.mxu0
        %v1405 = vadd.f32 %v1251, %v1404
        %1406 = vmatmul.f32.gmra.mxu0 %v1285
        %v1407 = vpop.f32.mrf.mxu0
        %v1408 = vadd.f32 %v1256, %v1407
        %1409 = vmatmul.f32.gmra.mxu0 %v1288
        %v1410 = vpop.f32.mrf.mxu0
        %v1411 = vadd.f32 %v1261, %v1410
        %1412 = vmatmul.f32.gmra.mxu0 %v1291
        %v1413 = vpop.f32.mrf.mxu0
        %v1414 = vadd.f32 %v1266, %v1413
        %1415 = vdwg.mxu0
        %1416 = vmatpush.msra.mxu0 0.0
        %1417 = vmatpush.msra.mxu0 0.0
        %1418 = vmatpush.msra.mxu0 0.0
        %1419 = vmatpush.msra.mxu0 0.0
        %1420 = vmatpush.msra.mxu0 0.0
        %1421 = vmatpush.msra.mxu0 0.0
        %1422 = vmatpush.msra.mxu0 0.0
        %1423 = vmatpush.msra.mxu0 0.0
        %1424 = vmatpush.msra.mxu0 0.0
        %1425 = vmatpush.msra.mxu0 0.0
        %1426 = vmatpush.msra.mxu0 0.0
        %1427 = vmatpush.msra.mxu0 0.0
        %1428 = vmatpush.msra.mxu0 0.0
        %1429 = vmatpush.msra.mxu0 %v1167
        %1430 = vmatpush.msra.mxu0 %v1146
        %1431 = vmatpush.msra.mxu0 %v1125
        %1432 = vmatmul.f32.gmra.mxu0 %v1270
        %v1433 = vpop.f32.mrf.mxu0
        %v1434 = vadd.f32 %v1231, %v1433
        %1435 = vmatmul.f32.gmra.mxu0 %v1273
        %v1436 = vpop.f32.mrf.mxu0
        %v1437 = vadd.f32 %v1236, %v1436
        %1438 = vmatmul.f32.gmra.mxu0 %v1276
        %v1439 = vpop.f32.mrf.mxu0
        %v1440 = vadd.f32 %v1241, %v1439
        %1441 = vmatmul.f32.gmra.mxu0 %v1279
        %v1442 = vpop.f32.mrf.mxu0
        %v1443 = vadd.f32 %v1246, %v1442
        %1444 = vmatmul.f32.gmra.mxu0 %v1282
        %v1445 = vpop.f32.mrf.mxu0
        %v1446 = vadd.f32 %v1251, %v1445
        %1447 = vmatmul.f32.gmra.mxu0 %v1285
        %v1448 = vpop.f32.mrf.mxu0
        %v1449 = vadd.f32 %v1256, %v1448
        %1450 = vmatmul.f32.gmra.mxu0 %v1288
        %v1451 = vpop.f32.mrf.mxu0
        %v1452 = vadd.f32 %v1261, %v1451
        %1453 = vmatmul.f32.gmra.mxu0 %v1291
        %v1454 = vpop.f32.mrf.mxu0
        %v1455 = vadd.f32 %v1266, %v1454
        %1456 = vdwg.mxu0
        %1457 = vmatpush.msra.mxu0 0.0
        %1458 = vmatpush.msra.mxu0 0.0
        %1459 = vmatpush.msra.mxu0 0.0
        %1460 = vmatpush.msra.mxu0 0.0
        %1461 = vmatpush.msra.mxu0 0.0
        %1462 = vmatpush.msra.mxu0 0.0
        %1463 = vmatpush.msra.mxu0 0.0
        %1464 = vmatpush.msra.mxu0 0.0
        %1465 = vmatpush.msra.mxu0 0.0
        %1466 = vmatpush.msra.mxu0 0.0
        %1467 = vmatpush.msra.mxu0 0.0
        %1468 = vmatpush.msra.mxu0 0.0
        %1469 = vmatpush.msra.mxu0 0.0
        %1470 = vmatpush.msra.mxu0 %v1168
        %1471 = vmatpush.msra.mxu0 %v1147
        %1472 = vmatpush.msra.mxu0 %v1126
        %1473 = vmatmul.f32.gmra.mxu0 %v1270
        %v1474 = vpop.f32.mrf.mxu0
        %v1475 = vadd.f32 %v1231, %v1474
        %1476 = vmatmul.f32.gmra.mxu0 %v1273
        %v1477 = vpop.f32.mrf.mxu0
        %v1478 = vadd.f32 %v1236, %v1477
        %1479 = vmatmul.f32.gmra.mxu0 %v1276
        %v1480 = vpop.f32.mrf.mxu0
        %v1481 = vadd.f32 %v1241, %v1480
        %1482 = vmatmul.f32.gmra.mxu0 %v1279
        %v1483 = vpop.f32.mrf.mxu0
        %v1484 = vadd.f32 %v1246, %v1483
        %1485 = vmatmul.f32.gmra.mxu0 %v1282
        %v1486 = vpop.f32.mrf.mxu0
        %v1487 = vadd.f32 %v1251, %v1486
        %1488 = vmatmul.f32.gmra.mxu0 %v1285
        %v1489 = vpop.f32.mrf.mxu0
        %v1490 = vadd.f32 %v1256, %v1489
        %1491 = vmatmul.f32.gmra.mxu0 %v1288
        %v1492 = vpop.f32.mrf.mxu0
        %v1493 = vadd.f32 %v1261, %v1492
        %1494 = vmatmul.f32.gmra.mxu0 %v1291
        %v1495 = vpop.f32.mrf.mxu0
        %v1496 = vadd.f32 %v1266, %v1495
        %1497 = vdwg.mxu0
        %1498 = vmatpush.msra.mxu0 0.0
        %1499 = vmatpush.msra.mxu0 0.0
        %1500 = vmatpush.msra.mxu0 0.0
        %1501 = vmatpush.msra.mxu0 0.0
        %1502 = vmatpush.msra.mxu0 0.0
        %1503 = vmatpush.msra.mxu0 0.0
        %1504 = vmatpush.msra.mxu0 0.0
        %1505 = vmatpush.msra.mxu0 0.0
        %1506 = vmatpush.msra.mxu0 0.0
        %1507 = vmatpush.msra.mxu0 0.0
        %1508 = vmatpush.msra.mxu0 0.0
        %1509 = vmatpush.msra.mxu0 0.0
        %1510 = vmatpush.msra.mxu0 0.0
        %1511 = vmatpush.msra.mxu0 %v1169
        %1512 = vmatpush.msra.mxu0 %v1148
        %1513 = vmatpush.msra.mxu0 %v1127
        %1514 = vmatmul.f32.gmra.mxu0 %v1270
        %v1515 = vpop.f32.mrf.mxu0
        %v1516 = vadd.f32 %v1231, %v1515
        %1517 = vmatmul.f32.gmra.mxu0 %v1273
        %v1518 = vpop.f32.mrf.mxu0
        %v1519 = vadd.f32 %v1236, %v1518
        %1520 = vmatmul.f32.gmra.mxu0 %v1276
        %v1521 = vpop.f32.mrf.mxu0
        %v1522 = vadd.f32 %v1241, %v1521
        %1523 = vmatmul.f32.gmra.mxu0 %v1279
        %v1524 = vpop.f32.mrf.mxu0
        %v1525 = vadd.f32 %v1246, %v1524
        %1526 = vmatmul.f32.gmra.mxu0 %v1282
        %v1527 = vpop.f32.mrf.mxu0
        %v1528 = vadd.f32 %v1251, %v1527
        %1529 = vmatmul.f32.gmra.mxu0 %v1285
        %v1530 = vpop.f32.mrf.mxu0
        %v1531 = vadd.f32 %v1256, %v1530
        %1532 = vmatmul.f32.gmra.mxu0 %v1288
        %v1533 = vpop.f32.mrf.mxu0
        %v1534 = vadd.f32 %v1261, %v1533
        %1535 = vmatmul.f32.gmra.mxu0 %v1291
        %v1536 = vpop.f32.mrf.mxu0
        %v1537 = vadd.f32 %v1266, %v1536
        %1538 = vdwg.mxu0
        %1539 = vmatpush.msra.mxu0 0.0
        %1540 = vmatpush.msra.mxu0 0.0
        %1541 = vmatpush.msra.mxu0 0.0
        %1542 = vmatpush.msra.mxu0 0.0
        %1543 = vmatpush.msra.mxu0 0.0
        %1544 = vmatpush.msra.mxu0 0.0
        %1545 = vmatpush.msra.mxu0 0.0
        %1546 = vmatpush.msra.mxu0 0.0
        %1547 = vmatpush.msra.mxu0 0.0
        %1548 = vmatpush.msra.mxu0 0.0
        %1549 = vmatpush.msra.mxu0 0.0
        %1550 = vmatpush.msra.mxu0 0.0
        %1551 = vmatpush.msra.mxu0 0.0
        %1552 = vmatpush.msra.mxu0 %v1170
        %1553 = vmatpush.msra.mxu0 %v1149
        %1554 = vmatpush.msra.mxu0 %v1128
        %1555 = vmatmul.f32.gmra.mxu0 %v1270
        %v1556 = vpop.f32.mrf.mxu0
        %v1557 = vadd.f32 %v1231, %v1556
        %1558 = vmatmul.f32.gmra.mxu0 %v1273
        %v1559 = vpop.f32.mrf.mxu0
        %v1560 = vadd.f32 %v1236, %v1559
        %1561 = vmatmul.f32.gmra.mxu0 %v1276
        %v1562 = vpop.f32.mrf.mxu0
        %v1563 = vadd.f32 %v1241, %v1562
        %1564 = vmatmul.f32.gmra.mxu0 %v1279
        %v1565 = vpop.f32.mrf.mxu0
        %v1566 = vadd.f32 %v1246, %v1565
        %1567 = vmatmul.f32.gmra.mxu0 %v1282
        %v1568 = vpop.f32.mrf.mxu0
        %v1569 = vadd.f32 %v1251, %v1568
        %1570 = vmatmul.f32.gmra.mxu0 %v1285
        %v1571 = vpop.f32.mrf.mxu0
        %v1572 = vadd.f32 %v1256, %v1571
        %1573 = vmatmul.f32.gmra.mxu0 %v1288
        %v1574 = vpop.f32.mrf.mxu0
        %v1575 = vadd.f32 %v1261, %v1574
        %1576 = vmatmul.f32.gmra.mxu0 %v1291
        %v1577 = vpop.f32.mrf.mxu0
        %v1578 = vadd.f32 %v1266, %v1577
        %1579 = vdwg.mxu0
        %1580 = vmatpush.msra.mxu0 0.0
        %1581 = vmatpush.msra.mxu0 0.0
        %1582 = vmatpush.msra.mxu0 0.0
        %1583 = vmatpush.msra.mxu0 0.0
        %1584 = vmatpush.msra.mxu0 0.0
        %1585 = vmatpush.msra.mxu0 0.0
        %1586 = vmatpush.msra.mxu0 0.0
        %1587 = vmatpush.msra.mxu0 0.0
        %1588 = vmatpush.msra.mxu0 0.0
        %1589 = vmatpush.msra.mxu0 0.0
        %1590 = vmatpush.msra.mxu0 0.0
        %1591 = vmatpush.msra.mxu0 0.0
        %1592 = vmatpush.msra.mxu0 0.0
        %1593 = vmatpush.msra.mxu0 %v1171
        %1594 = vmatpush.msra.mxu0 %v1150
        %1595 = vmatpush.msra.mxu0 %v1129
        %1596 = vmatmul.f32.gmra.mxu0 %v1270
        %v1597 = vpop.f32.mrf.mxu0
        %v1598 = vadd.f32 %v1231, %v1597
        %1599 = vmatmul.f32.gmra.mxu0 %v1273
        %v1600 = vpop.f32.mrf.mxu0
        %v1601 = vadd.f32 %v1236, %v1600
        %1602 = vmatmul.f32.gmra.mxu0 %v1276
        %v1603 = vpop.f32.mrf.mxu0
        %v1604 = vadd.f32 %v1241, %v1603
        %1605 = vmatmul.f32.gmra.mxu0 %v1279
        %v1606 = vpop.f32.mrf.mxu0
        %v1607 = vadd.f32 %v1246, %v1606
        %1608 = vmatmul.f32.gmra.mxu0 %v1282
        %v1609 = vpop.f32.mrf.mxu0
        %v1610 = vadd.f32 %v1251, %v1609
        %1611 = vmatmul.f32.gmra.mxu0 %v1285
        %v1612 = vpop.f32.mrf.mxu0
        %v1613 = vadd.f32 %v1256, %v1612
        %1614 = vmatmul.f32.gmra.mxu0 %v1288
        %v1615 = vpop.f32.mrf.mxu0
        %v1616 = vadd.f32 %v1261, %v1615
        %1617 = vmatmul.f32.gmra.mxu0 %v1291
        %v1618 = vpop.f32.mrf.mxu0
        %v1619 = vadd.f32 %v1266, %v1618
        %1620 = vdwg.mxu0
        %v1621 = vmax.f32 %v1311, 0.0
        %v1622 = vmax.f32 %v1352, 0.0
        %v1623 = vmax.f32 %v1393, 0.0
        %v1624 = vmax.f32 %v1434, 0.0
        %v1625 = vmax.f32 %v1475, 0.0
        %v1626 = vmax.f32 %v1516, 0.0
        %v1627 = vmax.f32 %v1557, 0.0
        %v1628 = vmax.f32 %v1598, 0.0
        %v1629 = vmax.f32 %v1314, 0.0
        %v1630 = vmax.f32 %v1355, 0.0
        %v1631 = vmax.f32 %v1396, 0.0
        %v1632 = vmax.f32 %v1437, 0.0
        %v1633 = vmax.f32 %v1478, 0.0
        %v1634 = vmax.f32 %v1519, 0.0
        %v1635 = vmax.f32 %v1560, 0.0
        %v1636 = vmax.f32 %v1601, 0.0
        %v1637 = vmax.f32 %v1317, 0.0
        %v1638 = vmax.f32 %v1358, 0.0
        %v1639 = vmax.f32 %v1399, 0.0
        %v1640 = vmax.f32 %v1440, 0.0
        %v1641 = vmax.f32 %v1481, 0.0
        %v1642 = vmax.f32 %v1522, 0.0
        %v1643 = vmax.f32 %v1563, 0.0
        %v1644 = vmax.f32 %v1604, 0.0
        %v1645 = vmax.f32 %v1320, 0.0
        %v1646 = vmax.f32 %v1361, 0.0
        %v1647 = vmax.f32 %v1402, 0.0
        %v1648 = vmax.f32 %v1443, 0.0
        %v1649 = vmax.f32 %v1484, 0.0
        %v1650 = vmax.f32 %v1525, 0.0
        %v1651 = vmax.f32 %v1566, 0.0
        %v1652 = vmax.f32 %v1607, 0.0
        %v1653 = vmax.f32 %v1323, 0.0
        %v1654 = vmax.f32 %v1364, 0.0
        %v1655 = vmax.f32 %v1405, 0.0
        %v1656 = vmax.f32 %v1446, 0.0
        %v1657 = vmax.f32 %v1487, 0.0
        %v1658 = vmax.f32 %v1528, 0.0
        %v1659 = vmax.f32 %v1569, 0.0
        %v1660 = vmax.f32 %v1610, 0.0
        %v1661 = vmax.f32 %v1326, 0.0
        %v1662 = vmax.f32 %v1367, 0.0
        %v1663 = vmax.f32 %v1408, 0.0
        %v1664 = vmax.f32 %v1449, 0.0
        %v1665 = vmax.f32 %v1490, 0.0
        %v1666 = vmax.f32 %v1531, 0.0
        %v1667 = vmax.f32 %v1572, 0.0
        %v1668 = vmax.f32 %v1613, 0.0
        %v1669 = vmax.f32 %v1329, 0.0
        %v1670 = vmax.f32 %v1370, 0.0
        %v1671 = vmax.f32 %v1411, 0.0
        %v1672 = vmax.f32 %v1452, 0.0
        %v1673 = vmax.f32 %v1493, 0.0
        %v1674 = vmax.f32 %v1534, 0.0
        %v1675 = vmax.f32 %v1575, 0.0
        %v1676 = vmax.f32 %v1616, 0.0
        %v1677 = vmax.f32 %v1332, 0.0
        %v1678 = vmax.f32 %v1373, 0.0
        %v1679 = vmax.f32 %v1414, 0.0
        %v1680 = vmax.f32 %v1455, 0.0
        %v1681 = vmax.f32 %v1496, 0.0
        %v1682 = vmax.f32 %v1537, 0.0
        %v1683 = vmax.f32 %v1578, 0.0
        %v1684 = vmax.f32 %v1619, 0.0
        %v1685 = vld [vmem:[%s6] sm:$0xff]
        %v1686 = vld [vmem:[%s6 + $0x8] sm:$0xff]
        %v1687 = vld [vmem:[%s6 + $0x10] sm:$0xff]
        %v1688 = vld [vmem:[%s6 + $0x18] sm:$0xff]
        %v1689 = vld [vmem:[%s6 + $0x20] sm:$0xff]
        %v1690 = vld [vmem:[%s6 + $0x28] sm:$0xff]
        %v1691 = vld [vmem:[%s6 + $0x30] sm:$0xff]
        %v1692 = vld [vmem:[%s6 + $0x38] sm:$0xff]
        %v1693 = vld [vmem:[%s7] sm:$0xff]
        %v1694 = vld [vmem:[%s7 + $0x8] sm:$0xff]
        %v1695 = vld [vmem:[%s7 + $0x10] sm:$0xff]
        %v1696 = vld [vmem:[%s7 + $0x18] sm:$0xff]
        %v1697 = vld [vmem:[%s7 + $0x20] sm:$0xff]
        %v1698 = vld [vmem:[%s7 + $0x28] sm:$0xff]
        %v1699 = vld [vmem:[%s7 + $0x30] sm:$0xff]
        %v1700 = vld [vmem:[%s7 + $0x38] sm:$0xff]
        %1702 = vset.pattern.permute.xlu0 0
        %1703 = vperm.xlu0 %1702, %v1693
        %v1704 = vpop.permute.xlu0 %1703
        %1707 = vset.pattern.permute.xlu0 0
        %1708 = vperm.xlu0 %1707, %v1694
        %v1709 = vpop.permute.xlu0 %1708
        %1712 = vset.pattern.permute.xlu0 0
        %1713 = vperm.xlu0 %1712, %v1695
        %v1714 = vpop.permute.xlu0 %1713
        %1717 = vset.pattern.permute.xlu0 0
        %1718 = vperm.xlu0 %1717, %v1696
        %v1719 = vpop.permute.xlu0 %1718
        %1722 = vset.pattern.permute.xlu0 0
        %1723 = vperm.xlu0 %1722, %v1697
        %v1724 = vpop.permute.xlu0 %1723
        %1727 = vset.pattern.permute.xlu0 0
        %1728 = vperm.xlu0 %1727, %v1698
        %v1729 = vpop.permute.xlu0 %1728
        %1732 = vset.pattern.permute.xlu0 0
        %1733 = vperm.xlu0 %1732, %v1699
        %v1734 = vpop.permute.xlu0 %1733
        %1737 = vset.pattern.permute.xlu0 0
        %1738 = vperm.xlu0 %1737, %v1700
        %v1739 = vpop.permute.xlu0 %1738
        %vm1741 = vcmask 523264
        %v1743 = vsel %vm1741, %v1685, 0
        %v1746 = vsel %vm1741, %v1686, 0
        %v1749 = vsel %vm1741, %v1687, 0
        %v1752 = vsel %vm1741, %v1688, 0
        %v1755 = vsel %vm1741, %v1689, 0
        %v1758 = vsel %vm1741, %v1690, 0
        %v1761 = vsel %vm1741, %v1691, 0
        %v1764 = vsel %vm1741, %v1692, 0
        %1766 = vmatpush.msra.mxu0 0.0
        %1767 = vmatpush.msra.mxu0 0.0
        %1768 = vmatpush.msra.mxu0 0.0
        %1769 = vmatpush.msra.mxu0 0.0
        %1770 = vmatpush.msra.mxu0 0.0
        %1771 = vmatpush.msra.mxu0 0.0
        %1772 = vmatpush.msra.mxu0 0.0
        %1773 = vmatpush.msra.mxu0 0.0
        %1774 = vmatpush.msra.mxu0 %v1677
        %1775 = vmatpush.msra.mxu0 %v1669
        %1776 = vmatpush.msra.mxu0 %v1661
        %1777 = vmatpush.msra.mxu0 %v1653
        %1778 = vmatpush.msra.mxu0 %v1645
        %1779 = vmatpush.msra.mxu0 %v1637
        %1780 = vmatpush.msra.mxu0 %v1629
        %1781 = vmatpush.msra.mxu0 %v1621
        %1782 = vmatmul.f32.gmra.mxu0 %v1743
        %v1783 = vpop.f32.mrf.mxu0
        %v1784 = vadd.f32 %v1704, %v1783
        %1785 = vmatmul.f32.gmra.mxu0 %v1746
        %v1786 = vpop.f32.mrf.mxu0
        %v1787 = vadd.f32 %v1709, %v1786
        %1788 = vmatmul.f32.gmra.mxu0 %v1749
        %v1789 = vpop.f32.mrf.mxu0
        %v1790 = vadd.f32 %v1714, %v1789
        %1791 = vmatmul.f32.gmra.mxu0 %v1752
        %v1792 = vpop.f32.mrf.mxu0
        %v1793 = vadd.f32 %v1719, %v1792
        %1794 = vmatmul.f32.gmra.mxu0 %v1755
        %v1795 = vpop.f32.mrf.mxu0
        %v1796 = vadd.f32 %v1724, %v1795
        %1797 = vmatmul.f32.gmra.mxu0 %v1758
        %v1798 = vpop.f32.mrf.mxu0
        %v1799 = vadd.f32 %v1729, %v1798
        %1800 = vmatmul.f32.gmra.mxu0 %v1761
        %v1801 = vpop.f32.mrf.mxu0
        %v1802 = vadd.f32 %v1734, %v1801
        %1803 = vmatmul.f32.gmra.mxu0 %v1764
        %v1804 = vpop.f32.mrf.mxu0
        %v1805 = vadd.f32 %v1739, %v1804
        %1806 = vdwg.mxu0
        %1807 = vmatpush.msra.mxu0 0.0
        %1808 = vmatpush.msra.mxu0 0.0
        %1809 = vmatpush.msra.mxu0 0.0
        %1810 = vmatpush.msra.mxu0 0.0
        %1811 = vmatpush.msra.mxu0 0.0
        %1812 = vmatpush.msra.mxu0 0.0
        %1813 = vmatpush.msra.mxu0 0.0
        %1814 = vmatpush.msra.mxu0 0.0
        %1815 = vmatpush.msra.mxu0 %v1678
        %1816 = vmatpush.msra.mxu0 %v1670
        %1817 = vmatpush.msra.mxu0 %v1662
        %1818 = vmatpush.msra.mxu0 %v1654
        %1819 = vmatpush.msra.mxu0 %v1646
        %1820 = vmatpush.msra.mxu0 %v1638
        %1821 = vmatpush.msra.mxu0 %v1630
        %1822 = vmatpush.msra.mxu0 %v1622
        %1823 = vmatmul.f32.gmra.mxu0 %v1743
        %v1824 = vpop.f32.mrf.mxu0
        %v1825 = vadd.f32 %v1704, %v1824
        %1826 = vmatmul.f32.gmra.mxu0 %v1746
        %v1827 = vpop.f32.mrf.mxu0
        %v1828 = vadd.f32 %v1709, %v1827
        %1829 = vmatmul.f32.gmra.mxu0 %v1749
        %v1830 = vpop.f32.mrf.mxu0
        %v1831 = vadd.f32 %v1714, %v1830
        %1832 = vmatmul.f32.gmra.mxu0 %v1752
        %v1833 = vpop.f32.mrf.mxu0
        %v1834 = vadd.f32 %v1719, %v1833
        %1835 = vmatmul.f32.gmra.mxu0 %v1755
        %v1836 = vpop.f32.mrf.mxu0
        %v1837 = vadd.f32 %v1724, %v1836
        %1838 = vmatmul.f32.gmra.mxu0 %v1758
        %v1839 = vpop.f32.mrf.mxu0
        %v1840 = vadd.f32 %v1729, %v1839
        %1841 = vmatmul.f32.gmra.mxu0 %v1761
        %v1842 = vpop.f32.mrf.mxu0
        %v1843 = vadd.f32 %v1734, %v1842
        %1844 = vmatmul.f32.gmra.mxu0 %v1764
        %v1845 = vpop.f32.mrf.mxu0
        %v1846 = vadd.f32 %v1739, %v1845
        %1847 = vdwg.mxu0
        %1848 = vmatpush.msra.mxu0 0.0
        %1849 = vmatpush.msra.mxu0 0.0
        %1850 = vmatpush.msra.mxu0 0.0
        %1851 = vmatpush.msra.mxu0 0.0
        %1852 = vmatpush.msra.mxu0 0.0
        %1853 = vmatpush.msra.mxu0 0.0
        %1854 = vmatpush.msra.mxu0 0.0
        %1855 = vmatpush.msra.mxu0 0.0
        %1856 = vmatpush.msra.mxu0 %v1679
        %1857 = vmatpush.msra.mxu0 %v1671
        %1858 = vmatpush.msra.mxu0 %v1663
        %1859 = vmatpush.msra.mxu0 %v1655
        %1860 = vmatpush.msra.mxu0 %v1647
        %1861 = vmatpush.msra.mxu0 %v1639
        %1862 = vmatpush.msra.mxu0 %v1631
        %1863 = vmatpush.msra.mxu0 %v1623
        %1864 = vmatmul.f32.gmra.mxu0 %v1743
        %v1865 = vpop.f32.mrf.mxu0
        %v1866 = vadd.f32 %v1704, %v1865
        %1867 = vmatmul.f32.gmra.mxu0 %v1746
        %v1868 = vpop.f32.mrf.mxu0
        %v1869 = vadd.f32 %v1709, %v1868
        %1870 = vmatmul.f32.gmra.mxu0 %v1749
        %v1871 = vpop.f32.mrf.mxu0
        %v1872 = vadd.f32 %v1714, %v1871
        %1873 = vmatmul.f32.gmra.mxu0 %v1752
        %v1874 = vpop.f32.mrf.mxu0
        %v1875 = vadd.f32 %v1719, %v1874
        %1876 = vmatmul.f32.gmra.mxu0 %v1755
        %v1877 = vpop.f32.mrf.mxu0
        %v1878 = vadd.f32 %v1724, %v1877
        %1879 = vmatmul.f32.gmra.mxu0 %v1758
        %v1880 = vpop.f32.mrf.mxu0
        %v1881 = vadd.f32 %v1729, %v1880
        %1882 = vmatmul.f32.gmra.mxu0 %v1761
        %v1883 = vpop.f32.mrf.mxu0
        %v1884 = vadd.f32 %v1734, %v1883
        %1885 = vmatmul.f32.gmra.mxu0 %v1764
        %v1886 = vpop.f32.mrf.mxu0
        %v1887 = vadd.f32 %v1739, %v1886
        %1888 = vdwg.mxu0
        %1889 = vmatpush.msra.mxu0 0.0
        %1890 = vmatpush.msra.mxu0 0.0
        %1891 = vmatpush.msra.mxu0 0.0
        %1892 = vmatpush.msra.mxu0 0.0
        %1893 = vmatpush.msra.mxu0 0.0
        %1894 = vmatpush.msra.mxu0 0.0
        %1895 = vmatpush.msra.mxu0 0.0
        %1896 = vmatpush.msra.mxu0 0.0
        %1897 = vmatpush.msra.mxu0 %v1680
        %1898 = vmatpush.msra.mxu0 %v1672
        %1899 = vmatpush.msra.mxu0 %v1664
        %1900 = vmatpush.msra.mxu0 %v1656
        %1901 = vmatpush.msra.mxu0 %v1648
        %1902 = vmatpush.msra.mxu0 %v1640
        %1903 = vmatpush.msra.mxu0 %v1632
        %1904 = vmatpush.msra.mxu0 %v1624
        %1905 = vmatmul.f32.gmra.mxu0 %v1743
        %v1906 = vpop.f32.mrf.mxu0
        %v1907 = vadd.f32 %v1704, %v1906
        %1908 = vmatmul.f32.gmra.mxu0 %v1746
        %v1909 = vpop.f32.mrf.mxu0
        %v1910 = vadd.f32 %v1709, %v1909
        %1911 = vmatmul.f32.gmra.mxu0 %v1749
        %v1912 = vpop.f32.mrf.mxu0
        %v1913 = vadd.f32 %v1714, %v1912
        %1914 = vmatmul.f32.gmra.mxu0 %v1752
        %v1915 = vpop.f32.mrf.mxu0
        %v1916 = vadd.f32 %v1719, %v1915
        %1917 = vmatmul.f32.gmra.mxu0 %v1755
        %v1918 = vpop.f32.mrf.mxu0
        %v1919 = vadd.f32 %v1724, %v1918
        %1920 = vmatmul.f32.gmra.mxu0 %v1758
        %v1921 = vpop.f32.mrf.mxu0
        %v1922 = vadd.f32 %v1729, %v1921
        %1923 = vmatmul.f32.gmra.mxu0 %v1761
        %v1924 = vpop.f32.mrf.mxu0
        %v1925 = vadd.f32 %v1734, %v1924
        %1926 = vmatmul.f32.gmra.mxu0 %v1764
        %v1927 = vpop.f32.mrf.mxu0
        %v1928 = vadd.f32 %v1739, %v1927
        %1929 = vdwg.mxu0
        %1930 = vmatpush.msra.mxu0 0.0
        %1931 = vmatpush.msra.mxu0 0.0
        %1932 = vmatpush.msra.mxu0 0.0
        %1933 = vmatpush.msra.mxu0 0.0
        %1934 = vmatpush.msra.mxu0 0.0
        %1935 = vmatpush.msra.mxu0 0.0
        %1936 = vmatpush.msra.mxu0 0.0
        %1937 = vmatpush.msra.mxu0 0.0
        %1938 = vmatpush.msra.mxu0 %v1681
        %1939 = vmatpush.msra.mxu0 %v1673
        %1940 = vmatpush.msra.mxu0 %v1665
        %1941 = vmatpush.msra.mxu0 %v1657
        %1942 = vmatpush.msra.mxu0 %v1649
        %1943 = vmatpush.msra.mxu0 %v1641
        %1944 = vmatpush.msra.mxu0 %v1633
        %1945 = vmatpush.msra.mxu0 %v1625
        %1946 = vmatmul.f32.gmra.mxu0 %v1743
        %v1947 = vpop.f32.mrf.mxu0
        %v1948 = vadd.f32 %v1704, %v1947
        %1949 = vmatmul.f32.gmra.mxu0 %v1746
        %v1950 = vpop.f32.mrf.mxu0
        %v1951 = vadd.f32 %v1709, %v1950
        %1952 = vmatmul.f32.gmra.mxu0 %v1749
        %v1953 = vpop.f32.mrf.mxu0
        %v1954 = vadd.f32 %v1714, %v1953
        %1955 = vmatmul.f32.gmra.mxu0 %v1752
        %v1956 = vpop.f32.mrf.mxu0
        %v1957 = vadd.f32 %v1719, %v1956
        %1958 = vmatmul.f32.gmra.mxu0 %v1755
        %v1959 = vpop.f32.mrf.mxu0
        %v1960 = vadd.f32 %v1724, %v1959
        %1961 = vmatmul.f32.gmra.mxu0 %v1758
        %v1962 = vpop.f32.mrf.mxu0
        %v1963 = vadd.f32 %v1729, %v1962
        %1964 = vmatmul.f32.gmra.mxu0 %v1761
        %v1965 = vpop.f32.mrf.mxu0
        %v1966 = vadd.f32 %v1734, %v1965
        %1967 = vmatmul.f32.gmra.mxu0 %v1764
        %v1968 = vpop.f32.mrf.mxu0
        %v1969 = vadd.f32 %v1739, %v1968
        %1970 = vdwg.mxu0
        %1971 = vmatpush.msra.mxu0 0.0
        %1972 = vmatpush.msra.mxu0 0.0
        %1973 = vmatpush.msra.mxu0 0.0
        %1974 = vmatpush.msra.mxu0 0.0
        %1975 = vmatpush.msra.mxu0 0.0
        %1976 = vmatpush.msra.mxu0 0.0
        %1977 = vmatpush.msra.mxu0 0.0
        %1978 = vmatpush.msra.mxu0 0.0
        %1979 = vmatpush.msra.mxu0 %v1682
        %1980 = vmatpush.msra.mxu0 %v1674
        %1981 = vmatpush.msra.mxu0 %v1666
        %1982 = vmatpush.msra.mxu0 %v1658
        %1983 = vmatpush.msra.mxu0 %v1650
        %1984 = vmatpush.msra.mxu0 %v1642
        %1985 = vmatpush.msra.mxu0 %v1634
        %1986 = vmatpush.msra.mxu0 %v1626
        %1987 = vmatmul.f32.gmra.mxu0 %v1743
        %v1988 = vpop.f32.mrf.mxu0
        %v1989 = vadd.f32 %v1704, %v1988
        %1990 = vmatmul.f32.gmra.mxu0 %v1746
        %v1991 = vpop.f32.mrf.mxu0
        %v1992 = vadd.f32 %v1709, %v1991
        %1993 = vmatmul.f32.gmra.mxu0 %v1749
        %v1994 = vpop.f32.mrf.mxu0
        %v1995 = vadd.f32 %v1714, %v1994
        %1996 = vmatmul.f32.gmra.mxu0 %v1752
        %v1997 = vpop.f32.mrf.mxu0
        %v1998 = vadd.f32 %v1719, %v1997
        %1999 = vmatmul.f32.gmra.mxu0 %v1755
        %v2000 = vpop.f32.mrf.mxu0
        %v2001 = vadd.f32 %v1724, %v2000
        %2002 = vmatmul.f32.gmra.mxu0 %v1758
        %v2003 = vpop.f32.mrf.mxu0
        %v2004 = vadd.f32 %v1729, %v2003
        %2005 = vmatmul.f32.gmra.mxu0 %v1761
        %v2006 = vpop.f32.mrf.mxu0
        %v2007 = vadd.f32 %v1734, %v2006
        %2008 = vmatmul.f32.gmra.mxu0 %v1764
        %v2009 = vpop.f32.mrf.mxu0
        %v2010 = vadd.f32 %v1739, %v2009
        %2011 = vdwg.mxu0
        %2012 = vmatpush.msra.mxu0 0.0
        %2013 = vmatpush.msra.mxu0 0.0
        %2014 = vmatpush.msra.mxu0 0.0
        %2015 = vmatpush.msra.mxu0 0.0
        %2016 = vmatpush.msra.mxu0 0.0
        %2017 = vmatpush.msra.mxu0 0.0
        %2018 = vmatpush.msra.mxu0 0.0
        %2019 = vmatpush.msra.mxu0 0.0
        %2020 = vmatpush.msra.mxu0 %v1683
        %2021 = vmatpush.msra.mxu0 %v1675
        %2022 = vmatpush.msra.mxu0 %v1667
        %2023 = vmatpush.msra.mxu0 %v1659
        %2024 = vmatpush.msra.mxu0 %v1651
        %2025 = vmatpush.msra.mxu0 %v1643
        %2026 = vmatpush.msra.mxu0 %v1635
        %2027 = vmatpush.msra.mxu0 %v1627
        %2028 = vmatmul.f32.gmra.mxu0 %v1743
        %v2029 = vpop.f32.mrf.mxu0
        %v2030 = vadd.f32 %v1704, %v2029
        %2031 = vmatmul.f32.gmra.mxu0 %v1746
        %v2032 = vpop.f32.mrf.mxu0
        %v2033 = vadd.f32 %v1709, %v2032
        %2034 = vmatmul.f32.gmra.mxu0 %v1749
        %v2035 = vpop.f32.mrf.mxu0
        %v2036 = vadd.f32 %v1714, %v2035
        %2037 = vmatmul.f32.gmra.mxu0 %v1752
        %v2038 = vpop.f32.mrf.mxu0
        %v2039 = vadd.f32 %v1719, %v2038
        %2040 = vmatmul.f32.gmra.mxu0 %v1755
        %v2041 = vpop.f32.mrf.mxu0
        %v2042 = vadd.f32 %v1724, %v2041
        %2043 = vmatmul.f32.gmra.mxu0 %v1758
        %v2044 = vpop.f32.mrf.mxu0
        %v2045 = vadd.f32 %v1729, %v2044
        %2046 = vmatmul.f32.gmra.mxu0 %v1761
        %v2047 = vpop.f32.mrf.mxu0
        %v2048 = vadd.f32 %v1734, %v2047
        %2049 = vmatmul.f32.gmra.mxu0 %v1764
        %v2050 = vpop.f32.mrf.mxu0
        %v2051 = vadd.f32 %v1739, %v2050
        %2052 = vdwg.mxu0
        %2053 = vmatpush.msra.mxu0 0.0
        %2054 = vmatpush.msra.mxu0 0.0
        %2055 = vmatpush.msra.mxu0 0.0
        %2056 = vmatpush.msra.mxu0 0.0
        %2057 = vmatpush.msra.mxu0 0.0
        %2058 = vmatpush.msra.mxu0 0.0
        %2059 = vmatpush.msra.mxu0 0.0
        %2060 = vmatpush.msra.mxu0 0.0
        %2061 = vmatpush.msra.mxu0 %v1684
        %2062 = vmatpush.msra.mxu0 %v1676
        %2063 = vmatpush.msra.mxu0 %v1668
        %2064 = vmatpush.msra.mxu0 %v1660
        %2065 = vmatpush.msra.mxu0 %v1652
        %2066 = vmatpush.msra.mxu0 %v1644
        %2067 = vmatpush.msra.mxu0 %v1636
        %2068 = vmatpush.msra.mxu0 %v1628
        %2069 = vmatmul.f32.gmra.mxu0 %v1743
        %v2070 = vpop.f32.mrf.mxu0
        %v2071 = vadd.f32 %v1704, %v2070
        %2072 = vmatmul.f32.gmra.mxu0 %v1746
        %v2073 = vpop.f32.mrf.mxu0
        %v2074 = vadd.f32 %v1709, %v2073
        %2075 = vmatmul.f32.gmra.mxu0 %v1749
        %v2076 = vpop.f32.mrf.mxu0
        %v2077 = vadd.f32 %v1714, %v2076
        %2078 = vmatmul.f32.gmra.mxu0 %v1752
        %v2079 = vpop.f32.mrf.mxu0
        %v2080 = vadd.f32 %v1719, %v2079
        %2081 = vmatmul.f32.gmra.mxu0 %v1755
        %v2082 = vpop.f32.mrf.mxu0
        %v2083 = vadd.f32 %v1724, %v2082
        %2084 = vmatmul.f32.gmra.mxu0 %v1758
        %v2085 = vpop.f32.mrf.mxu0
        %v2086 = vadd.f32 %v1729, %v2085
        %2087 = vmatmul.f32.gmra.mxu0 %v1761
        %v2088 = vpop.f32.mrf.mxu0
        %v2089 = vadd.f32 %v1734, %v2088
        %2090 = vmatmul.f32.gmra.mxu0 %v1764
        %v2091 = vpop.f32.mrf.mxu0
        %v2092 = vadd.f32 %v1739, %v2091
        %2093 = vdwg.mxu0
        %v2094 = vmax.f32 %v1784, 0.0
        %v2095 = vmax.f32 %v1825, 0.0
        %v2096 = vmax.f32 %v1866, 0.0
        %v2097 = vmax.f32 %v1907, 0.0
        %v2098 = vmax.f32 %v1948, 0.0
        %v2099 = vmax.f32 %v1989, 0.0
        %v2100 = vmax.f32 %v2030, 0.0
        %v2101 = vmax.f32 %v2071, 0.0
        %v2102 = vmax.f32 %v1787, 0.0
        %v2103 = vmax.f32 %v1828, 0.0
        %v2104 = vmax.f32 %v1869, 0.0
        %v2105 = vmax.f32 %v1910, 0.0
        %v2106 = vmax.f32 %v1951, 0.0
        %v2107 = vmax.f32 %v1992, 0.0
        %v2108 = vmax.f32 %v2033, 0.0
        %v2109 = vmax.f32 %v2074, 0.0
        %v2110 = vmax.f32 %v1790, 0.0
        %v2111 = vmax.f32 %v1831, 0.0
        %v2112 = vmax.f32 %v1872, 0.0
        %v2113 = vmax.f32 %v1913, 0.0
        %v2114 = vmax.f32 %v1954, 0.0
        %v2115 = vmax.f32 %v1995, 0.0
        %v2116 = vmax.f32 %v2036, 0.0
        %v2117 = vmax.f32 %v2077, 0.0
        %v2118 = vmax.f32 %v1793, 0.0
        %v2119 = vmax.f32 %v1834, 0.0
        %v2120 = vmax.f32 %v1875, 0.0
        %v2121 = vmax.f32 %v1916, 0.0
        %v2122 = vmax.f32 %v1957, 0.0
        %v2123 = vmax.f32 %v1998, 0.0
        %v2124 = vmax.f32 %v2039, 0.0
        %v2125 = vmax.f32 %v2080, 0.0
        %v2126 = vmax.f32 %v1796, 0.0
        %v2127 = vmax.f32 %v1837, 0.0
        %v2128 = vmax.f32 %v1878, 0.0
        %v2129 = vmax.f32 %v1919, 0.0
        %v2130 = vmax.f32 %v1960, 0.0
        %v2131 = vmax.f32 %v2001, 0.0
        %v2132 = vmax.f32 %v2042, 0.0
        %v2133 = vmax.f32 %v2083, 0.0
        %v2134 = vmax.f32 %v1799, 0.0
        %v2135 = vmax.f32 %v1840, 0.0
        %v2136 = vmax.f32 %v1881, 0.0
        %v2137 = vmax.f32 %v1922, 0.0
        %v2138 = vmax.f32 %v1963, 0.0
        %v2139 = vmax.f32 %v2004, 0.0
        %v2140 = vmax.f32 %v2045, 0.0
        %v2141 = vmax.f32 %v2086, 0.0
        %v2142 = vmax.f32 %v1802, 0.0
        %v2143 = vmax.f32 %v1843, 0.0
        %v2144 = vmax.f32 %v1884, 0.0
        %v2145 = vmax.f32 %v1925, 0.0
        %v2146 = vmax.f32 %v1966, 0.0
        %v2147 = vmax.f32 %v2007, 0.0
        %v2148 = vmax.f32 %v2048, 0.0
        %v2149 = vmax.f32 %v2089, 0.0
        %v2150 = vmax.f32 %v1805, 0.0
        %v2151 = vmax.f32 %v1846, 0.0
        %v2152 = vmax.f32 %v1887, 0.0
        %v2153 = vmax.f32 %v1928, 0.0
        %v2154 = vmax.f32 %v1969, 0.0
        %v2155 = vmax.f32 %v2010, 0.0
        %v2156 = vmax.f32 %v2051, 0.0
        %v2157 = vmax.f32 %v2092, 0.0
        %v2158 = vld [vmem:[%s8] sm:$0xff]
        %v2159 = vld [vmem:[%s9] sm:$0xff]
        %2161 = vset.pattern.permute.xlu0 0
        %2162 = vperm.xlu0 %2161, %v2159
        %v2163 = vpop.permute.xlu0 %2162
        %v2166 = vsel %vm1741, %v2158, 0
        %2168 = vmatpush.msra.mxu0 0.0
        %2169 = vmatpush.msra.mxu0 0.0
        %2170 = vmatpush.msra.mxu0 0.0
        %2171 = vmatpush.msra.mxu0 0.0
        %2172 = vmatpush.msra.mxu0 0.0
        %2173 = vmatpush.msra.mxu0 0.0
        %2174 = vmatpush.msra.mxu0 0.0
        %2175 = vmatpush.msra.mxu0 0.0
        %2176 = vmatpush.msra.mxu0 %v2150
        %2177 = vmatpush.msra.mxu0 %v2142
        %2178 = vmatpush.msra.mxu0 %v2134
        %2179 = vmatpush.msra.mxu0 %v2126
        %2180 = vmatpush.msra.mxu0 %v2118
        %2181 = vmatpush.msra.mxu0 %v2110
        %2182 = vmatpush.msra.mxu0 %v2102
        %2183 = vmatpush.msra.mxu0 %v2094
        %2184 = vmatmul.f32.gmra.mxu0 %v2166
        %v2185 = vpop.f32.mrf.mxu0
        %v2186 = vadd.f32 %v2163, %v2185
        %2187 = vdwg.mxu0
        %2188 = vmatpush.msra.mxu0 0.0
        %2189 = vmatpush.msra.mxu0 0.0
        %2190 = vmatpush.msra.mxu0 0.0
        %2191 = vmatpush.msra.mxu0 0.0
        %2192 = vmatpush.msra.mxu0 0.0
        %2193 = vmatpush.msra.mxu0 0.0
        %2194 = vmatpush.msra.mxu0 0.0
        %2195 = vmatpush.msra.mxu0 0.0
        %2196 = vmatpush.msra.mxu0 %v2151
        %2197 = vmatpush.msra.mxu0 %v2143
        %2198 = vmatpush.msra.mxu0 %v2135
        %2199 = vmatpush.msra.mxu0 %v2127
        %2200 = vmatpush.msra.mxu0 %v2119
        %2201 = vmatpush.msra.mxu0 %v2111
        %2202 = vmatpush.msra.mxu0 %v2103
        %2203 = vmatpush.msra.mxu0 %v2095
        %2204 = vmatmul.f32.gmra.mxu0 %v2166
        %v2205 = vpop.f32.mrf.mxu0
        %v2206 = vadd.f32 %v2163, %v2205
        %2207 = vdwg.mxu0
        %2208 = vmatpush.msra.mxu0 0.0
        %2209 = vmatpush.msra.mxu0 0.0
        %2210 = vmatpush.msra.mxu0 0.0
        %2211 = vmatpush.msra.mxu0 0.0
        %2212 = vmatpush.msra.mxu0 0.0
        %2213 = vmatpush.msra.mxu0 0.0
        %2214 = vmatpush.msra.mxu0 0.0
        %2215 = vmatpush.msra.mxu0 0.0
        %2216 = vmatpush.msra.mxu0 %v2152
        %2217 = vmatpush.msra.mxu0 %v2144
        %2218 = vmatpush.msra.mxu0 %v2136
        %2219 = vmatpush.msra.mxu0 %v2128
        %2220 = vmatpush.msra.mxu0 %v2120
        %2221 = vmatpush.msra.mxu0 %v2112
        %2222 = vmatpush.msra.mxu0 %v2104
        %2223 = vmatpush.msra.mxu0 %v2096
        %2224 = vmatmul.f32.gmra.mxu0 %v2166
        %v2225 = vpop.f32.mrf.mxu0
        %v2226 = vadd.f32 %v2163, %v2225
        %2227 = vdwg.mxu0
        %2228 = vmatpush.msra.mxu0 0.0
        %2229 = vmatpush.msra.mxu0 0.0
        %2230 = vmatpush.msra.mxu0 0.0
        %2231 = vmatpush.msra.mxu0 0.0
        %2232 = vmatpush.msra.mxu0 0.0
        %2233 = vmatpush.msra.mxu0 0.0
        %2234 = vmatpush.msra.mxu0 0.0
        %2235 = vmatpush.msra.mxu0 0.0
        %2236 = vmatpush.msra.mxu0 %v2153
        %2237 = vmatpush.msra.mxu0 %v2145
        %2238 = vmatpush.msra.mxu0 %v2137
        %2239 = vmatpush.msra.mxu0 %v2129
        %2240 = vmatpush.msra.mxu0 %v2121
        %2241 = vmatpush.msra.mxu0 %v2113
        %2242 = vmatpush.msra.mxu0 %v2105
        %2243 = vmatpush.msra.mxu0 %v2097
        %2244 = vmatmul.f32.gmra.mxu0 %v2166
        %v2245 = vpop.f32.mrf.mxu0
        %v2246 = vadd.f32 %v2163, %v2245
        %2247 = vdwg.mxu0
        %2248 = vmatpush.msra.mxu0 0.0
        %2249 = vmatpush.msra.mxu0 0.0
        %2250 = vmatpush.msra.mxu0 0.0
        %2251 = vmatpush.msra.mxu0 0.0
        %2252 = vmatpush.msra.mxu0 0.0
        %2253 = vmatpush.msra.mxu0 0.0
        %2254 = vmatpush.msra.mxu0 0.0
        %2255 = vmatpush.msra.mxu0 0.0
        %2256 = vmatpush.msra.mxu0 %v2154
        %2257 = vmatpush.msra.mxu0 %v2146
        %2258 = vmatpush.msra.mxu0 %v2138
        %2259 = vmatpush.msra.mxu0 %v2130
        %2260 = vmatpush.msra.mxu0 %v2122
        %2261 = vmatpush.msra.mxu0 %v2114
        %2262 = vmatpush.msra.mxu0 %v2106
        %2263 = vmatpush.msra.mxu0 %v2098
        %2264 = vmatmul.f32.gmra.mxu0 %v2166
        %v2265 = vpop.f32.mrf.mxu0
        %v2266 = vadd.f32 %v2163, %v2265
        %2267 = vdwg.mxu0
        %2268 = vmatpush.msra.mxu0 0.0
        %2269 = vmatpush.msra.mxu0 0.0
        %2270 = vmatpush.msra.mxu0 0.0
        %2271 = vmatpush.msra.mxu0 0.0
        %2272 = vmatpush.msra.mxu0 0.0
        %2273 = vmatpush.msra.mxu0 0.0
        %2274 = vmatpush.msra.mxu0 0.0
        %2275 = vmatpush.msra.mxu0 0.0
        %2276 = vmatpush.msra.mxu0 %v2155
        %2277 = vmatpush.msra.mxu0 %v2147
        %2278 = vmatpush.msra.mxu0 %v2139
        %2279 = vmatpush.msra.mxu0 %v2131
        %2280 = vmatpush.msra.mxu0 %v2123
        %2281 = vmatpush.msra.mxu0 %v2115
        %2282 = vmatpush.msra.mxu0 %v2107
        %2283 = vmatpush.msra.mxu0 %v2099
        %2284 = vmatmul.f32.gmra.mxu0 %v2166
        %v2285 = vpop.f32.mrf.mxu0
        %v2286 = vadd.f32 %v2163, %v2285
        %2287 = vdwg.mxu0
        %2288 = vmatpush.msra.mxu0 0.0
        %2289 = vmatpush.msra.mxu0 0.0
        %2290 = vmatpush.msra.mxu0 0.0
        %2291 = vmatpush.msra.mxu0 0.0
        %2292 = vmatpush.msra.mxu0 0.0
        %2293 = vmatpush.msra.mxu0 0.0
        %2294 = vmatpush.msra.mxu0 0.0
        %2295 = vmatpush.msra.mxu0 0.0
        %2296 = vmatpush.msra.mxu0 %v2156
        %2297 = vmatpush.msra.mxu0 %v2148
        %2298 = vmatpush.msra.mxu0 %v2140
        %2299 = vmatpush.msra.mxu0 %v2132
        %2300 = vmatpush.msra.mxu0 %v2124
        %2301 = vmatpush.msra.mxu0 %v2116
        %2302 = vmatpush.msra.mxu0 %v2108
        %2303 = vmatpush.msra.mxu0 %v2100
        %2304 = vmatmul.f32.gmra.mxu0 %v2166
        %v2305 = vpop.f32.mrf.mxu0
        %v2306 = vadd.f32 %v2163, %v2305
        %2307 = vdwg.mxu0
        %2308 = vmatpush.msra.mxu0 0.0
        %2309 = vmatpush.msra.mxu0 0.0
        %2310 = vmatpush.msra.mxu0 0.0
        %2311 = vmatpush.msra.mxu0 0.0
        %2312 = vmatpush.msra.mxu0 0.0
        %2313 = vmatpush.msra.mxu0 0.0
        %2314 = vmatpush.msra.mxu0 0.0
        %2315 = vmatpush.msra.mxu0 0.0
        %2316 = vmatpush.msra.mxu0 %v2157
        %2317 = vmatpush.msra.mxu0 %v2149
        %2318 = vmatpush.msra.mxu0 %v2141
        %2319 = vmatpush.msra.mxu0 %v2133
        %2320 = vmatpush.msra.mxu0 %v2125
        %2321 = vmatpush.msra.mxu0 %v2117
        %2322 = vmatpush.msra.mxu0 %v2109
        %2323 = vmatpush.msra.mxu0 %v2101
        %2324 = vmatmul.f32.gmra.mxu0 %v2166
        %v2325 = vpop.f32.mrf.mxu0
        %v2326 = vadd.f32 %v2163, %v2325
        %2327 = vdwg.mxu0
        %v2328 = vmax.f32 %v2186, 0.0
        %v2329 = vmax.f32 %v2206, 0.0
        %v2330 = vmax.f32 %v2226, 0.0
        %v2331 = vmax.f32 %v2246, 0.0
        %v2332 = vmax.f32 %v2266, 0.0
        %v2333 = vmax.f32 %v2286, 0.0
        %v2334 = vmax.f32 %v2306, 0.0
        %v2335 = vmax.f32 %v2326, 0.0
        %v2336 = vmul.f32 %v2328, 0.1
        %v2337 = vmul.f32 %v2329, 0.1
        %v2338 = vmul.f32 %v2330, 0.1
        %v2339 = vmul.f32 %v2331, 0.1
        %v2340 = vmul.f32 %v2332, 0.1
        %v2341 = vmul.f32 %v2333, 0.1
        %v2342 = vmul.f32 %v2334, 0.1
        %v2343 = vmul.f32 %v2335, 0.1
        %2344 = vst [vmem:[%s490] sm:$0xff] %v2336
        %2345 = vst [vmem:[%s490 + $0x8] sm:$0xff] %v2337
        %2346 = vst [vmem:[%s490 + $0x10] sm:$0xff] %v2338
        %2347 = vst [vmem:[%s490 + $0x18] sm:$0xff] %v2339
        %2348 = vst [vmem:[%s490 + $0x20] sm:$0xff] %v2340
        %2349 = vst [vmem:[%s490 + $0x28] sm:$0xff] %v2341
        %2350 = vst [vmem:[%s490 + $0x30] sm:$0xff] %v2342
        %2351 = vst [vmem:[%s490 + $0x38] sm:$0xff] %v2343
        %v2352 = vadd.f32 %v1204, %v2336
        %v2353 = vadd.f32 %v1205, %v2337
        %v2354 = vadd.f32 %v1206, %v2338
        %v2355 = vadd.f32 %v1207, %v2339
        %v2356 = vadd.f32 %v1208, %v2340
        %v2357 = vadd.f32 %v1209, %v2341
        %v2358 = vadd.f32 %v1210, %v2342
        %v2359 = vadd.f32 %v1211, %v2343
        %v2360 = vsub.f32 0.0, %v2352
        %v2361 = vsub.f32 0.0, %v2353
        %v2362 = vsub.f32 0.0, %v2354
        %v2363 = vsub.f32 0.0, %v2355
        %v2364 = vsub.f32 0.0, %v2356
        %v2365 = vsub.f32 0.0, %v2357
        %v2366 = vsub.f32 0.0, %v2358
        %v2367 = vsub.f32 0.0, %v2359
        %2368 = vst [vmem:[%s483] sm:$0xff] %v2360
        %2369 = vst [vmem:[%s483 + $0x8] sm:$0xff] %v2361
        %2370 = vst [vmem:[%s483 + $0x10] sm:$0xff] %v2362
        %2371 = vst [vmem:[%s483 + $0x18] sm:$0xff] %v2363
        %2372 = vst [vmem:[%s483 + $0x20] sm:$0xff] %v2364
        %2373 = vst [vmem:[%s483 + $0x28] sm:$0xff] %v2365
        %2374 = vst [vmem:[%s483 + $0x30] sm:$0xff] %v2366
        %2375 = vst [vmem:[%s483 + $0x38] sm:$0xff] %v2367
        %s2376 = sand.u32 %s273, 1
        %s2377 = scalar_lea.sflag [#allocation4], %s2376
        %s2378 = sand.u32 %s273, 1
        %s2379 = smul.addr %s2378, 64
        %s2380 = scalar_lea.vmem [#allocation7], %s2379
        %s2381 = sand.u32 %s299, 1
        %s2382 = scalar_lea.sflag [#allocation9], %s2381
        %s2383 = sand.u32 %s299, 1
        %s2384 = smul.addr %s2383, 64
        %s2385 = scalar_lea.vmem [#allocation8], %s2384
        // Predicated region
        $region69: #{tpu_custom_call.1} parent=59 // pred_check
          %p2386 = pneg %p283
        $region70: #{tpu_custom_call.1} parent=59 // pred_check_branch
          %2388 = sbr.rel (%p2386) target = $region72
        $region71: #{tpu_custom_call.1} parent=59 // pred_region
          %s2389 = smul.u32 8, %s35
          %2391 = vsyncadd %s2377, 0
          %s2392 = smul.addr %s2389, 8
          %s2393 = scalar_lea.hbm %s10, %s2392
          %s2395 = sshll.u32 %s2380, 4
          %s2396 = int_to_ptr.vmem [resolvable:$true] %s2395
          %s2397 = sshll.u32 %s2393, 4
          %s2398 = int_to_ptr.hbm [resolvable:$true] %s2397
          %2400 = dma.vmem_to_hbm [thread:$0]  %s2396, 1024, %s2398, %s2377
        $region72: #{tpu_custom_call.1} parent=59 // pred_fallthru
          _
        // Predicated region
        $region73: #{tpu_custom_call.1} parent=59 // pred_check
          %p2401 = pneg %p309
        $region74: #{tpu_custom_call.1} parent=59 // pred_check_branch
          %2403 = sbr.rel (%p2401) target = $region76
        $region75: #{tpu_custom_call.1} parent=59 // pred_region
          %s2404 = smul.u32 8, %s35
          %2406 = vsyncadd %s2382, 0
          %s2407 = smul.addr %s2404, 8
          %s2408 = scalar_lea.hbm %s11, %s2407
          %s2410 = sshll.u32 %s2385, 4
          %s2411 = int_to_ptr.vmem [resolvable:$true] %s2410
          %s2412 = sshll.u32 %s2408, 4
          %s2413 = int_to_ptr.hbm [resolvable:$true] %s2412
          %2415 = dma.vmem_to_hbm [thread:$0]  %s2411, 1024, %s2413, %s2382
        $region76: #{tpu_custom_call.1} parent=59 // pred_fallthru
          _
      $region60: #{tpu_custom_call.1} parent=5 // pred_fallthru
        _
      %p2416 = scmp.le.s32.totalorder 2, %s30
      // Predicated region
      $region77: #{tpu_custom_call.1} parent=5 // pred_check
        %p2417 = pneg %p2416
      $region78: #{tpu_custom_call.1} parent=5 // pred_check_branch
        %2419 = sbr.rel (%p2417) target = $region80
      $region79: #{tpu_custom_call.1} parent=5 // pred_region
        %s2420 = ssub.s32 %s30, 2
        // Predicated region
        $region81: #{tpu_custom_call.1} parent=79 // pred_check
          %p2421 = pneg %p289
        $region82: #{tpu_custom_call.1} parent=79 // pred_check_branch
          %2423 = sbr.rel (%p2421) target = $region84
        $region83: #{tpu_custom_call.1} parent=79 // pred_region
          %s2424 = sand.u32 %s274, 1
          %s2425 = scalar_lea.sflag [#allocation4], %s2424
          %s2426 = sand.u32 %s274, 1
          %s2427 = smul.addr %s2426, 64
          %s2428 = scalar_lea.vmem [#allocation7], %s2427
          %2430 = dma.done %s2425, 1024
        $region84: #{tpu_custom_call.1} parent=79 // pred_fallthru
          _
        // Predicated region
        $region85: #{tpu_custom_call.1} parent=79 // pred_check
          %p2431 = pneg %p315
        $region86: #{tpu_custom_call.1} parent=79 // pred_check_branch
          %2433 = sbr.rel (%p2431) target = $region88
        $region87: #{tpu_custom_call.1} parent=79 // pred_region
          %s2434 = sand.u32 %s300, 1
          %s2435 = scalar_lea.sflag [#allocation9], %s2434
          %s2436 = sand.u32 %s300, 1
          %s2437 = smul.addr %s2436, 64
          %s2438 = scalar_lea.vmem [#allocation8], %s2437
          %2440 = dma.done %s2435, 1024
        $region88: #{tpu_custom_call.1} parent=79 // pred_fallthru
          _
      $region80: #{tpu_custom_call.1} parent=5 // pred_fallthru
        _
    $region6: #{tpu_custom_call.1} parent=1 // loop_footer
      %s34 = sadd.s32 1, %s30
    $region7: #{tpu_custom_call.1} parent=1 // loop_footer_branch
      %29 = sbr.rel target = $region3
    $region8: #{tpu_custom_call.1} parent=1 // loop_exit
      _
    %2441 = vsyncpa [#allocation3], 1
    %s2442 = scalar_lea.sflag [#allocation3], 1
    %2443 = vsyncpa %s2442, 1
    %2444 = vsyncpa [#allocation6], 1
    %s2445 = scalar_lea.sflag [#allocation6], 1
    %2446 = vsyncpa %s2445, 1
    %2447 = vsyncpa [#allocation4], 1
    %s2448 = scalar_lea.sflag [#allocation4], 1
    %2449 = vsyncpa %s2448, 1
    %2450 = vsyncpa [#allocation9], 1
    %s2451 = scalar_lea.sflag [#allocation9], 1
    %2452 = vsyncpa %s2451, 1

</llo_original>
